<compile_context>
chip_gen: v6e
topology: v6e:2x2x1
jax: 0.10.0
libtpu: 0.0.40
codegen_flags: <defaults>
</compile_context>

<pallas_src>
import jax
import jax.numpy as jnp
from jax import lax
from jax.experimental import pallas as pl
from jax.experimental.pallas import tpu as pltpu


def _round_up(x, m):
    return ((x + m - 1) // m) * m


def _pad_gates(w, H, Hp, axis=0):
    """Pad each of the 3 stacked GRU gates (r|z|n) from H to Hp along `axis`."""
    if H == Hp:
        return w
    pad_width = [(0, 0)] * w.ndim
    pad_width[axis] = (0, Hp - H)
    parts = []
    for g in range(3):
        sl = [slice(None)] * w.ndim
        sl[axis] = slice(g * H, (g + 1) * H)
        parts.append(jnp.pad(w[tuple(sl)], pad_width))
    return jnp.concatenate(parts, axis=axis)


# ----------------------------- Pallas kernel -------------------------------
def gru_kernel(x_ref, wih_ref, whh_ref, bih_ref, bhh_ref, wf_ref, bf_ref,
               out_ref, gx_ref):
    # x_ref  : (T, TB, D)    time-major input block (bf16)
    # wih_ref: (D, 3Hp)      W_ih^T  (gate order r | z | n, lane-padded, bf16)
    # whh_ref: (Hp, 3Hp)     W_hh^T  (lane-padded, f32)
    # bih_ref: (1, 3Hp)      b_ih (zero-padded, f32)
    # bhh_ref: (1, 3Hp)      b_hh (zero-padded, f32)
    # wf_ref : (Hp, 128)     fc weight^T zero-padded to 128 lanes (f32)
    # bf_ref : (1, 128)      fc bias zero-padded (f32)
    # out_ref: (TB, 128)     lane-dense output (col 0 is the real fc output)
    # gx_ref : (T, TB, 3Hp)  VMEM scratch: precomputed input projections (f32)
    T, TB, D = x_ref.shape
    Hp = whh_ref.shape[0]

    # ---- input projection for all timesteps in one bf16 MXU matmul ---------
    x_flat = x_ref[...].reshape(T * TB, D)                       # free reshape
    gx = jnp.dot(x_flat, wih_ref[...], preferred_element_type=jnp.float32)
    gx_ref[...] = (gx + bih_ref[...]).reshape(T, TB, 3 * Hp)

    # hoist loop-invariant weight / bias reads out of the recurrence
    whh = whh_ref[...]
    bhh = bhh_ref[...]

    # ---- sequential GRU recurrence over time (unrolled) ---------------------
    def step(t, h):
        gxt = gx_ref[t]                                          # (TB, 3Hp)
        gh = jnp.dot(h, whh, preferred_element_type=jnp.float32) + bhh
        r = jax.nn.sigmoid(gxt[:, :Hp] + gh[:, :Hp])
        z = jax.nn.sigmoid(gxt[:, Hp:2 * Hp] + gh[:, Hp:2 * Hp])
        n = jnp.tanh(gxt[:, 2 * Hp:] + r * gh[:, 2 * Hp:])
        return (1.0 - z) * n + z * h

    h0 = jnp.zeros((TB, Hp), jnp.float32)
    unroll = True if T <= 64 else 8
    hT = lax.fori_loop(0, T, step, h0, unroll=unroll)            # (TB, Hp)

    # ---- fused fc: Linear(hidden -> 1), lane-padded to 128 ------------------
    out_ref[...] = (jnp.dot(hT, wf_ref[...],
                            preferred_element_type=jnp.float32) + bf_ref[...])


# ------------------------------- wrapper ------------------------------------
def _pick_tiling(B, T, D, Hp, budget_bytes):
    """Pick (TB, n_tiles): >=2 tiles for real batches (v7x 2-TC split), small
    padding waste, and VMEM usage under budget."""
    def vmem_bytes(tb):
        x_buf = 2 * T * tb * D * 2                  # double-buffered bf16 x
        gx = T * tb * 3 * Hp * 4                    # f32 scratch
        out = 2 * tb * 128 * 4
        w = 2 * (D * 3 * Hp * 2 + Hp * 3 * Hp * 4 + 2 * 3 * Hp * 4
                 + Hp * 128 * 4 + 128 * 4)
        return x_buf + gx + out + w

    n_tiles = max(2 if B >= 16 else 1, pl.cdiv(B, 256))
    TB = _round_up(pl.cdiv(B, n_tiles), 8)
    while TB > 8 and vmem_bytes(TB) > budget_bytes:
        n_tiles += 1
        TB = _round_up(pl.cdiv(B, n_tiles), 8)
    return TB, n_tiles


def gru_forward(x, w_ih, w_hh, b_ih, b_hh, fc_w, fc_b):
    """x: (B, T, D); w_ih: (3H, D); w_hh: (3H, H); b_*: (3H,);
    fc_w: (1, H); fc_b: (1,).  Returns (B, 1)."""
    B, T, D = x.shape
    H = w_hh.shape[1]
    Hp = _round_up(H, 128)                     # lane-padded hidden per gate
    NP = 128                                   # lane-dense padded output width

    # conservative budget (fits v5e 16 MiB / v6e 32 MiB / v7x 32 MiB scoped
    # defaults once we also raise vmem_limit_bytes below)
    TB, n_tiles = _pick_tiling(B, T, D, Hp, budget_bytes=36 * 1024 * 1024)
    Bp = TB * n_tiles

    # time-major, batch padded with zero rows (sliced away at the end).
    # Note: with tiny D the DMA inner contiguous run is TB*D*2 bytes; TB is
    # kept as large as the VMEM budget allows to keep bursts reasonable.
    xt = jnp.transpose(x, (1, 0, 2)).astype(jnp.bfloat16)         # (T, B, D)
    if Bp != B:
        xt = jnp.pad(xt, ((0, 0), (0, Bp - B), (0, 0)))

    # gate-wise zero-padding H -> Hp so every gate occupies full 128-lane blocks
    wih = jnp.transpose(_pad_gates(w_ih.astype(jnp.float32), H, Hp, axis=0)
                        ).astype(jnp.bfloat16)                    # (D, 3Hp)
    whh_p = _pad_gates(w_hh.astype(jnp.float32), H, Hp, axis=0)   # (3Hp, H)
    whh_p = jnp.pad(whh_p, ((0, 0), (0, Hp - H)))
    whh = jnp.transpose(whh_p)                                    # (Hp, 3Hp)
    bih = _pad_gates(b_ih.astype(jnp.float32), H, Hp).reshape(1, 3 * Hp)
    bhh = _pad_gates(b_hh.astype(jnp.float32), H, Hp).reshape(1, 3 * Hp)
    wf = jnp.zeros((Hp, NP), jnp.float32).at[:H, 0].set(
        fc_w.reshape(H).astype(jnp.float32))
    bf = jnp.zeros((1, NP), jnp.float32).at[0, 0].set(
        fc_b.reshape(()).astype(jnp.float32))

    out = pl.pallas_call(
        gru_kernel,
        out_shape=jax.ShapeDtypeStruct((Bp, NP), jnp.float32),
        grid=(Bp // TB,),
        in_specs=[
            pl.BlockSpec((T, TB, D), lambda i: (0, i, 0)),        # x (tiled)
            pl.BlockSpec((D, 3 * Hp), lambda i: (0, 0)),          # W_ih^T
            pl.BlockSpec((Hp, 3 * Hp), lambda i: (0, 0)),         # W_hh^T
            pl.BlockSpec((1, 3 * Hp), lambda i: (0, 0)),          # b_ih
            pl.BlockSpec((1, 3 * Hp), lambda i: (0, 0)),          # b_hh
            pl.BlockSpec((Hp, NP), lambda i: (0, 0)),             # fc W^T (pad)
            pl.BlockSpec((1, NP), lambda i: (0, 0)),              # fc b (pad)
        ],
        out_specs=pl.BlockSpec((TB, NP), lambda i: (i, 0)),
        scratch_shapes=[pltpu.VMEM((T, TB, 3 * Hp), jnp.float32)],
        compiler_params=pltpu.CompilerParams(
            dimension_semantics=("parallel",),
            vmem_limit_bytes=48 * 1024 * 1024),
    )(xt, wih, whh, bih, bhh, wf, bf)

    return out[:B, :1]


# --------------------------- pure-JAX reference ------------------------------
def ref_forward(x, w_ih, w_hh, b_ih, b_hh, fc_w, fc_b):
    B, T, D = x.shape
    H = w_hh.shape[1]
    h = jnp.zeros((B, H), jnp.float32)
    for t in range(T):
        xt = x[:, t, :]
        gi = xt @ w_ih.T + b_ih[None, :]
        gh = h @ w_hh.T + b_hh[None, :]
        r = jax.nn.sigmoid(gi[:, :H] + gh[:, :H])
        z = jax.nn.sigmoid(gi[:, H:2 * H] + gh[:, H:2 * H])
        n = jnp.tanh(gi[:, 2 * H:] + r * gh[:, 2 * H:])
        h = (1.0 - z) * n + z * h
    return h @ fc_w.T + fc_b[None, :]


if __name__ == "__main__":
    # Module hyperparameters (defaults: n_layers=1, unidirectional, dropout=0)
    B, T, D, H = 2, 8, 16, 32

    key = jax.random.PRNGKey(0)
    ks = jax.random.split(key, 7)
    bound = 1.0 / (H ** 0.5)   # PyTorch GRU / Linear default uniform bound

    w_ih = jax.random.uniform(ks[0], (3 * H, D), jnp.float32, -bound, bound)
    w_hh = jax.random.uniform(ks[1], (3 * H, H), jnp.float32, -bound, bound)
    b_ih = jax.random.uniform(ks[2], (3 * H,), jnp.float32, -bound, bound)
    b_hh = jax.random.uniform(ks[3], (3 * H,), jnp.float32, -bound, bound)
    fc_w = jax.random.uniform(ks[4], (1, H), jnp.float32, -bound, bound)
    fc_b = jax.random.uniform(ks[5], (1,), jnp.float32, -bound, bound)
    x = jax.random.normal(ks[6], (B, T, D), jnp.float32)

    out = gru_forward(x, w_ih, w_hh, b_ih, b_hh, fc_w, fc_b)
    out = jax.block_until_ready(out)

    ref = ref_forward(x, w_ih, w_hh, b_ih, b_hh, fc_w, fc_b)
    assert out.shape == (B, 1)
    # bf16 x / W_ih on the MXU (f32 accumulation) -> slightly loosened tolerance
    assert jnp.allclose(out, ref, atol=1e-2, rtol=1e-2), (out, ref)
    print("KERNEL_OK")
</pallas_src>

<mosaic_0001>
module attributes {stable_mosaic.version = 11 : i64} {
  func.func @gru_kernel(%arg0: i32, %arg1: memref<8x8x16xbf16, #tpu.memory_space<vmem>>, %arg2: memref<16x384xbf16, #tpu.memory_space<vmem>>, %arg3: memref<128x384xf32, #tpu.memory_space<vmem>>, %arg4: memref<1x384xf32, #tpu.memory_space<vmem>>, %arg5: memref<1x384xf32, #tpu.memory_space<vmem>>, %arg6: memref<128x128xf32, #tpu.memory_space<vmem>>, %arg7: memref<1x128xf32, #tpu.memory_space<vmem>>, %arg8: memref<8x128xf32, #tpu.memory_space<vmem>>, %arg9: memref<8x8x384xf32, #tpu.memory_space<vmem>>) attributes {dimension_semantics = [#tpu.dimension_semantics<parallel>], iteration_bounds = array<i64: 1>, scalar_prefetch = 0 : i64, scratch_operands = 1 : i64, tpu.core_type = #tpu.core_type<tc>, window_params = [{transform_indices = @transform_0, window_bounds = array<i64: 8, 8, 16>}, {pipeline_mode = #tpu.pipeline_mode<synchronous>, transform_indices = @transform_1, window_bounds = array<i64: 16, 384>}, {pipeline_mode = #tpu.pipeline_mode<synchronous>, transform_indices = @transform_2, window_bounds = array<i64: 128, 384>}, {pipeline_mode = #tpu.pipeline_mode<synchronous>, transform_indices = @transform_3, window_bounds = array<i64: 1, 384>}, {pipeline_mode = #tpu.pipeline_mode<synchronous>, transform_indices = @transform_4, window_bounds = array<i64: 1, 384>}, {pipeline_mode = #tpu.pipeline_mode<synchronous>, transform_indices = @transform_5, window_bounds = array<i64: 128, 128>}, {pipeline_mode = #tpu.pipeline_mode<synchronous>, transform_indices = @transform_6, window_bounds = array<i64: 1, 128>}, {transform_indices = @transform_7, window_bounds = array<i64: 8, 128>}]} {
    %c0 = arith.constant 0 : index
    %c0_0 = arith.constant 0 : index
    %c0_1 = arith.constant 0 : index
    %0 = vector.load %arg1[%c0, %c0_0, %c0_1] : memref<8x8x16xbf16, #tpu.memory_space<vmem>>, vector<8x8x16xbf16>
    %1 = vector.shape_cast %0 : vector<8x8x16xbf16> to vector<64x16xbf16>
    %c0_2 = arith.constant 0 : index
    %c0_3 = arith.constant 0 : index
    %2 = vector.load %arg2[%c0_2, %c0_3] : memref<16x384xbf16, #tpu.memory_space<vmem>>, vector<16x384xbf16>
    %cst = arith.constant dense<0.000000e+00> : vector<64x384xf32>
    %3 = tpu.matmul %1, %2, %cst {dimension_numbers = #tpu.dot_dimension_numbers<[1], [0], [0], [1], [0, 0, 1, 1], [], []>} : vector<64x16xbf16>, vector<16x384xbf16>, vector<64x384xf32> -> vector<64x384xf32>
    %c0_4 = arith.constant 0 : index
    %c0_5 = arith.constant 0 : index
    %4 = vector.load %arg4[%c0_4, %c0_5] : memref<1x384xf32, #tpu.memory_space<vmem>>, vector<1x384xf32>
    %5 = vector.broadcast %4 : vector<1x384xf32> to vector<64x384xf32>
    %6 = arith.addf %3, %5 : vector<64x384xf32>
    %7 = vector.shape_cast %6 : vector<64x384xf32> to vector<8x8x384xf32>
    %c0_6 = arith.constant 0 : index
    %c0_7 = arith.constant 0 : index
    %c0_8 = arith.constant 0 : index
    %8 = vector.load %arg9[%c0_6, %c0_7, %c0_8] : memref<8x8x384xf32, #tpu.memory_space<vmem>>, vector<8x8x384xf32>
    tpu.vector_store %arg9[%c0_6, %c0_7, %c0_8], %7 {strides = array<i32>} : memref<8x8x384xf32, #tpu.memory_space<vmem>>, vector<8x8x384xf32>,
    %c0_9 = arith.constant 0 : index
    %c0_10 = arith.constant 0 : index
    %9 = vector.load %arg3[%c0_9, %c0_10] : memref<128x384xf32, #tpu.memory_space<vmem>>, vector<128x384xf32>
    %c0_11 = arith.constant 0 : index
    %c0_12 = arith.constant 0 : index
    %10 = vector.load %arg5[%c0_11, %c0_12] : memref<1x384xf32, #tpu.memory_space<vmem>>, vector<1x384xf32>
    %cst_13 = arith.constant 0.000000e+00 : f32
    %11 = vector.broadcast %cst_13 : f32 to vector<8x128xf32>
    %c0_i32 = arith.constant 0 : i32
    %12 = arith.index_cast %c0_i32 : i32 to index
    %c0_14 = arith.constant 0 : index
    %c0_15 = arith.constant 0 : index
    %13 = vector.load %arg9[%12, %c0_14, %c0_15] : memref<8x8x384xf32, #tpu.memory_space<vmem>>, vector<1x8x384xf32>
    %14 = vector.shape_cast %13 : vector<1x8x384xf32> to vector<8x384xf32>
    %cst_16 = arith.constant dense<0.000000e+00> : vector<8x384xf32>
    %15 = tpu.matmul %11, %9, %cst_16 {dimension_numbers = #tpu.dot_dimension_numbers<[1], [0], [0], [1], [0, 0, 1, 1], [], []>} : vector<8x128xf32>, vector<128x384xf32>, vector<8x384xf32> -> vector<8x384xf32>
    %16 = vector.broadcast %10 : vector<1x384xf32> to vector<8x384xf32>
    %17 = arith.addf %15, %16 : vector<8x384xf32>
    %18 = vector.extract_strided_slice %14 {offsets = [0, 0], sizes = [8, 128], strides = [1, 1]} : vector<8x384xf32> to vector<8x128xf32>
    %19 = vector.extract_strided_slice %17 {offsets = [0, 0], sizes = [8, 128], strides = [1, 1]} : vector<8x384xf32> to vector<8x128xf32>
    %20 = arith.addf %18, %19 : vector<8x128xf32>
    %21 = arith.negf %20 : vector<8x128xf32>
    %22 = math.exp %21 : vector<8x128xf32>
    %cst_17 = arith.constant 1.000000e+00 : f32
    %23 = vector.broadcast %cst_17 : f32 to vector<8x128xf32>
    %24 = arith.addf %23, %22 : vector<8x128xf32>
    %25 = arith.divf %23, %24 : vector<8x128xf32>
    %26 = vector.extract_strided_slice %14 {offsets = [0, 128], sizes = [8, 128], strides = [1, 1]} : vector<8x384xf32> to vector<8x128xf32>
    %27 = vector.extract_strided_slice %17 {offsets = [0, 128], sizes = [8, 128], strides = [1, 1]} : vector<8x384xf32> to vector<8x128xf32>
    %28 = arith.addf %26, %27 : vector<8x128xf32>
    %29 = arith.negf %28 : vector<8x128xf32>
    %30 = math.exp %29 : vector<8x128xf32>
    %cst_18 = arith.constant 1.000000e+00 : f32
    %31 = vector.broadcast %cst_18 : f32 to vector<8x128xf32>
    %32 = arith.addf %31, %30 : vector<8x128xf32>
    %33 = arith.divf %31, %32 : vector<8x128xf32>
    %34 = vector.extract_strided_slice %14 {offsets = [0, 256], sizes = [8, 128], strides = [1, 1]} : vector<8x384xf32> to vector<8x128xf32>
    %35 = vector.extract_strided_slice %17 {offsets = [0, 256], sizes = [8, 128], strides = [1, 1]} : vector<8x384xf32> to vector<8x128xf32>
    %36 = arith.mulf %25, %35 : vector<8x128xf32>
    %37 = arith.addf %34, %36 : vector<8x128xf32>
    %38 = math.tanh %37 : vector<8x128xf32>
    %cst_19 = arith.constant 1.000000e+00 : f32
    %39 = vector.broadcast %cst_19 : f32 to vector<8x128xf32>
    %40 = arith.subf %39, %33 : vector<8x128xf32>
    %41 = arith.mulf %40, %38 : vector<8x128xf32>
    %42 = arith.mulf %33, %11 : vector<8x128xf32>
    %43 = arith.addf %41, %42 : vector<8x128xf32>
    %c1_i32 = arith.constant 1 : i32
    %44 = arith.index_cast %c1_i32 : i32 to index
    %c0_20 = arith.constant 0 : index
    %c0_21 = arith.constant 0 : index
    %45 = vector.load %arg9[%44, %c0_20, %c0_21] : memref<8x8x384xf32, #tpu.memory_space<vmem>>, vector<1x8x384xf32>
    %46 = vector.shape_cast %45 : vector<1x8x384xf32> to vector<8x384xf32>
    %cst_22 = arith.constant dense<0.000000e+00> : vector<8x384xf32>
    %47 = tpu.matmul %43, %9, %cst_22 {dimension_numbers = #tpu.dot_dimension_numbers<[1], [0], [0], [1], [0, 0, 1, 1], [], []>} : vector<8x128xf32>, vector<128x384xf32>, vector<8x384xf32> -> vector<8x384xf32>
    %48 = vector.broadcast %10 : vector<1x384xf32> to vector<8x384xf32>
    %49 = arith.addf %47, %48 : vector<8x384xf32>
    %50 = vector.extract_strided_slice %46 {offsets = [0, 0], sizes = [8, 128], strides = [1, 1]} : vector<8x384xf32> to vector<8x128xf32>
    %51 = vector.extract_strided_slice %49 {offsets = [0, 0], sizes = [8, 128], strides = [1, 1]} : vector<8x384xf32> to vector<8x128xf32>
    %52 = arith.addf %50, %51 : vector<8x128xf32>
    %53 = arith.negf %52 : vector<8x128xf32>
    %54 = math.exp %53 : vector<8x128xf32>
    %cst_23 = arith.constant 1.000000e+00 : f32
    %55 = vector.broadcast %cst_23 : f32 to vector<8x128xf32>
    %56 = arith.addf %55, %54 : vector<8x128xf32>
    %57 = arith.divf %55, %56 : vector<8x128xf32>
    %58 = vector.extract_strided_slice %46 {offsets = [0, 128], sizes = [8, 128], strides = [1, 1]} : vector<8x384xf32> to vector<8x128xf32>
    %59 = vector.extract_strided_slice %49 {offsets = [0, 128], sizes = [8, 128], strides = [1, 1]} : vector<8x384xf32> to vector<8x128xf32>
    %60 = arith.addf %58, %59 : vector<8x128xf32>
    %61 = arith.negf %60 : vector<8x128xf32>
    %62 = math.exp %61 : vector<8x128xf32>
    %cst_24 = arith.constant 1.000000e+00 : f32
    %63 = vector.broadcast %cst_24 : f32 to vector<8x128xf32>
    %64 = arith.addf %63, %62 : vector<8x128xf32>
    %65 = arith.divf %63, %64 : vector<8x128xf32>
    %66 = vector.extract_strided_slice %46 {offsets = [0, 256], sizes = [8, 128], strides = [1, 1]} : vector<8x384xf32> to vector<8x128xf32>
    %67 = vector.extract_strided_slice %49 {offsets = [0, 256], sizes = [8, 128], strides = [1, 1]} : vector<8x384xf32> to vector<8x128xf32>
    %68 = arith.mulf %57, %67 : vector<8x128xf32>
    %69 = arith.addf %66, %68 : vector<8x128xf32>
    %70 = math.tanh %69 : vector<8x128xf32>
    %cst_25 = arith.constant 1.000000e+00 : f32
    %71 = vector.broadcast %cst_25 : f32 to vector<8x128xf32>
    %72 = arith.subf %71, %65 : vector<8x128xf32>
    %73 = arith.mulf %72, %70 : vector<8x128xf32>
    %74 = arith.mulf %65, %43 : vector<8x128xf32>
    %75 = arith.addf %73, %74 : vector<8x128xf32>
    %c2_i32 = arith.constant 2 : i32
    %76 = arith.index_cast %c2_i32 : i32 to index
    %c0_26 = arith.constant 0 : index
    %c0_27 = arith.constant 0 : index
    %77 = vector.load %arg9[%76, %c0_26, %c0_27] : memref<8x8x384xf32, #tpu.memory_space<vmem>>, vector<1x8x384xf32>
    %78 = vector.shape_cast %77 : vector<1x8x384xf32> to vector<8x384xf32>
    %cst_28 = arith.constant dense<0.000000e+00> : vector<8x384xf32>
    %79 = tpu.matmul %75, %9, %cst_28 {dimension_numbers = #tpu.dot_dimension_numbers<[1], [0], [0], [1], [0, 0, 1, 1], [], []>} : vector<8x128xf32>, vector<128x384xf32>, vector<8x384xf32> -> vector<8x384xf32>
    %80 = vector.broadcast %10 : vector<1x384xf32> to vector<8x384xf32>
    %81 = arith.addf %79, %80 : vector<8x384xf32>
    %82 = vector.extract_strided_slice %78 {offsets = [0, 0], sizes = [8, 128], strides = [1, 1]} : vector<8x384xf32> to vector<8x128xf32>
    %83 = vector.extract_strided_slice %81 {offsets = [0, 0], sizes = [8, 128], strides = [1, 1]} : vector<8x384xf32> to vector<8x128xf32>
    %84 = arith.addf %82, %83 : vector<8x128xf32>
    %85 = arith.negf %84 : vector<8x128xf32>
    %86 = math.exp %85 : vector<8x128xf32>
    %cst_29 = arith.constant 1.000000e+00 : f32
    %87 = vector.broadcast %cst_29 : f32 to vector<8x128xf32>
    %88 = arith.addf %87, %86 : vector<8x128xf32>
    %89 = arith.divf %87, %88 : vector<8x128xf32>
    %90 = vector.extract_strided_slice %78 {offsets = [0, 128], sizes = [8, 128], strides = [1, 1]} : vector<8x384xf32> to vector<8x128xf32>
    %91 = vector.extract_strided_slice %81 {offsets = [0, 128], sizes = [8, 128], strides = [1, 1]} : vector<8x384xf32> to vector<8x128xf32>
    %92 = arith.addf %90, %91 : vector<8x128xf32>
    %93 = arith.negf %92 : vector<8x128xf32>
    %94 = math.exp %93 : vector<8x128xf32>
    %cst_30 = arith.constant 1.000000e+00 : f32
    %95 = vector.broadcast %cst_30 : f32 to vector<8x128xf32>
    %96 = arith.addf %95, %94 : vector<8x128xf32>
    %97 = arith.divf %95, %96 : vector<8x128xf32>
    %98 = vector.extract_strided_slice %78 {offsets = [0, 256], sizes = [8, 128], strides = [1, 1]} : vector<8x384xf32> to vector<8x128xf32>
    %99 = vector.extract_strided_slice %81 {offsets = [0, 256], sizes = [8, 128], strides = [1, 1]} : vector<8x384xf32> to vector<8x128xf32>
    %100 = arith.mulf %89, %99 : vector<8x128xf32>
    %101 = arith.addf %98, %100 : vector<8x128xf32>
    %102 = math.tanh %101 : vector<8x128xf32>
    %cst_31 = arith.constant 1.000000e+00 : f32
    %103 = vector.broadcast %cst_31 : f32 to vector<8x128xf32>
    %104 = arith.subf %103, %97 : vector<8x128xf32>
    %105 = arith.mulf %104, %102 : vector<8x128xf32>
    %106 = arith.mulf %97, %75 : vector<8x128xf32>
    %107 = arith.addf %105, %106 : vector<8x128xf32>
    %c3_i32 = arith.constant 3 : i32
    %108 = arith.index_cast %c3_i32 : i32 to index
    %c0_32 = arith.constant 0 : index
    %c0_33 = arith.constant 0 : index
    %109 = vector.load %arg9[%108, %c0_32, %c0_33] : memref<8x8x384xf32, #tpu.memory_space<vmem>>, vector<1x8x384xf32>
    %110 = vector.shape_cast %109 : vector<1x8x384xf32> to vector<8x384xf32>
    %cst_34 = arith.constant dense<0.000000e+00> : vector<8x384xf32>
    %111 = tpu.matmul %107, %9, %cst_34 {dimension_numbers = #tpu.dot_dimension_numbers<[1], [0], [0], [1], [0, 0, 1, 1], [], []>} : vector<8x128xf32>, vector<128x384xf32>, vector<8x384xf32> -> vector<8x384xf32>
    %112 = vector.broadcast %10 : vector<1x384xf32> to vector<8x384xf32>
    %113 = arith.addf %111, %112 : vector<8x384xf32>
    %114 = vector.extract_strided_slice %110 {offsets = [0, 0], sizes = [8, 128], strides = [1, 1]} : vector<8x384xf32> to vector<8x128xf32>
    %115 = vector.extract_strided_slice %113 {offsets = [0, 0], sizes = [8, 128], strides = [1, 1]} : vector<8x384xf32> to vector<8x128xf32>
    %116 = arith.addf %114, %115 : vector<8x128xf32>
    %117 = arith.negf %116 : vector<8x128xf32>
    %118 = math.exp %117 : vector<8x128xf32>
    %cst_35 = arith.constant 1.000000e+00 : f32
    %119 = vector.broadcast %cst_35 : f32 to vector<8x128xf32>
    %120 = arith.addf %119, %118 : vector<8x128xf32>
    %121 = arith.divf %119, %120 : vector<8x128xf32>
    %122 = vector.extract_strided_slice %110 {offsets = [0, 128], sizes = [8, 128], strides = [1, 1]} : vector<8x384xf32> to vector<8x128xf32>
    %123 = vector.extract_strided_slice %113 {offsets = [0, 128], sizes = [8, 128], strides = [1, 1]} : vector<8x384xf32> to vector<8x128xf32>
    %124 = arith.addf %122, %123 : vector<8x128xf32>
    %125 = arith.negf %124 : vector<8x128xf32>
    %126 = math.exp %125 : vector<8x128xf32>
    %cst_36 = arith.constant 1.000000e+00 : f32
    %127 = vector.broadcast %cst_36 : f32 to vector<8x128xf32>
    %128 = arith.addf %127, %126 : vector<8x128xf32>
    %129 = arith.divf %127, %128 : vector<8x128xf32>
    %130 = vector.extract_strided_slice %110 {offsets = [0, 256], sizes = [8, 128], strides = [1, 1]} : vector<8x384xf32> to vector<8x128xf32>
    %131 = vector.extract_strided_slice %113 {offsets = [0, 256], sizes = [8, 128], strides = [1, 1]} : vector<8x384xf32> to vector<8x128xf32>
    %132 = arith.mulf %121, %131 : vector<8x128xf32>
    %133 = arith.addf %130, %132 : vector<8x128xf32>
    %134 = math.tanh %133 : vector<8x128xf32>
    %cst_37 = arith.constant 1.000000e+00 : f32
    %135 = vector.broadcast %cst_37 : f32 to vector<8x128xf32>
    %136 = arith.subf %135, %129 : vector<8x128xf32>
    %137 = arith.mulf %136, %134 : vector<8x128xf32>
    %138 = arith.mulf %129, %107 : vector<8x128xf32>
    %139 = arith.addf %137, %138 : vector<8x128xf32>
    %c4_i32 = arith.constant 4 : i32
    %140 = arith.index_cast %c4_i32 : i32 to index
    %c0_38 = arith.constant 0 : index
    %c0_39 = arith.constant 0 : index
    %141 = vector.load %arg9[%140, %c0_38, %c0_39] : memref<8x8x384xf32, #tpu.memory_space<vmem>>, vector<1x8x384xf32>
    %142 = vector.shape_cast %141 : vector<1x8x384xf32> to vector<8x384xf32>
    %cst_40 = arith.constant dense<0.000000e+00> : vector<8x384xf32>
    %143 = tpu.matmul %139, %9, %cst_40 {dimension_numbers = #tpu.dot_dimension_numbers<[1], [0], [0], [1], [0, 0, 1, 1], [], []>} : vector<8x128xf32>, vector<128x384xf32>, vector<8x384xf32> -> vector<8x384xf32>
    %144 = vector.broadcast %10 : vector<1x384xf32> to vector<8x384xf32>
    %145 = arith.addf %143, %144 : vector<8x384xf32>
    %146 = vector.extract_strided_slice %142 {offsets = [0, 0], sizes = [8, 128], strides = [1, 1]} : vector<8x384xf32> to vector<8x128xf32>
    %147 = vector.extract_strided_slice %145 {offsets = [0, 0], sizes = [8, 128], strides = [1, 1]} : vector<8x384xf32> to vector<8x128xf32>
    %148 = arith.addf %146, %147 : vector<8x128xf32>
    %149 = arith.negf %148 : vector<8x128xf32>
    %150 = math.exp %149 : vector<8x128xf32>
    %cst_41 = arith.constant 1.000000e+00 : f32
    %151 = vector.broadcast %cst_41 : f32 to vector<8x128xf32>
    %152 = arith.addf %151, %150 : vector<8x128xf32>
    %153 = arith.divf %151, %152 : vector<8x128xf32>
    %154 = vector.extract_strided_slice %142 {offsets = [0, 128], sizes = [8, 128], strides = [1, 1]} : vector<8x384xf32> to vector<8x128xf32>
    %155 = vector.extract_strided_slice %145 {offsets = [0, 128], sizes = [8, 128], strides = [1, 1]} : vector<8x384xf32> to vector<8x128xf32>
    %156 = arith.addf %154, %155 : vector<8x128xf32>
    %157 = arith.negf %156 : vector<8x128xf32>
    %158 = math.exp %157 : vector<8x128xf32>
    %cst_42 = arith.constant 1.000000e+00 : f32
    %159 = vector.broadcast %cst_42 : f32 to vector<8x128xf32>
    %160 = arith.addf %159, %158 : vector<8x128xf32>
    %161 = arith.divf %159, %160 : vector<8x128xf32>
    %162 = vector.extract_strided_slice %142 {offsets = [0, 256], sizes = [8, 128], strides = [1, 1]} : vector<8x384xf32> to vector<8x128xf32>
    %163 = vector.extract_strided_slice %145 {offsets = [0, 256], sizes = [8, 128], strides = [1, 1]} : vector<8x384xf32> to vector<8x128xf32>
    %164 = arith.mulf %153, %163 : vector<8x128xf32>
    %165 = arith.addf %162, %164 : vector<8x128xf32>
    %166 = math.tanh %165 : vector<8x128xf32>
    %cst_43 = arith.constant 1.000000e+00 : f32
    %167 = vector.broadcast %cst_43 : f32 to vector<8x128xf32>
    %168 = arith.subf %167, %161 : vector<8x128xf32>
    %169 = arith.mulf %168, %166 : vector<8x128xf32>
    %170 = arith.mulf %161, %139 : vector<8x128xf32>
    %171 = arith.addf %169, %170 : vector<8x128xf32>
    %c5_i32 = arith.constant 5 : i32
    %172 = arith.index_cast %c5_i32 : i32 to index
    %c0_44 = arith.constant 0 : index
    %c0_45 = arith.constant 0 : index
    %173 = vector.load %arg9[%172, %c0_44, %c0_45] : memref<8x8x384xf32, #tpu.memory_space<vmem>>, vector<1x8x384xf32>
    %174 = vector.shape_cast %173 : vector<1x8x384xf32> to vector<8x384xf32>
    %cst_46 = arith.constant dense<0.000000e+00> : vector<8x384xf32>
    %175 = tpu.matmul %171, %9, %cst_46 {dimension_numbers = #tpu.dot_dimension_numbers<[1], [0], [0], [1], [0, 0, 1, 1], [], []>} : vector<8x128xf32>, vector<128x384xf32>, vector<8x384xf32> -> vector<8x384xf32>
    %176 = vector.broadcast %10 : vector<1x384xf32> to vector<8x384xf32>
    %177 = arith.addf %175, %176 : vector<8x384xf32>
    %178 = vector.extract_strided_slice %174 {offsets = [0, 0], sizes = [8, 128], strides = [1, 1]} : vector<8x384xf32> to vector<8x128xf32>
    %179 = vector.extract_strided_slice %177 {offsets = [0, 0], sizes = [8, 128], strides = [1, 1]} : vector<8x384xf32> to vector<8x128xf32>
    %180 = arith.addf %178, %179 : vector<8x128xf32>
    %181 = arith.negf %180 : vector<8x128xf32>
    %182 = math.exp %181 : vector<8x128xf32>
    %cst_47 = arith.constant 1.000000e+00 : f32
    %183 = vector.broadcast %cst_47 : f32 to vector<8x128xf32>
    %184 = arith.addf %183, %182 : vector<8x128xf32>
    %185 = arith.divf %183, %184 : vector<8x128xf32>
    %186 = vector.extract_strided_slice %174 {offsets = [0, 128], sizes = [8, 128], strides = [1, 1]} : vector<8x384xf32> to vector<8x128xf32>
    %187 = vector.extract_strided_slice %177 {offsets = [0, 128], sizes = [8, 128], strides = [1, 1]} : vector<8x384xf32> to vector<8x128xf32>
    %188 = arith.addf %186, %187 : vector<8x128xf32>
    %189 = arith.negf %188 : vector<8x128xf32>
    %190 = math.exp %189 : vector<8x128xf32>
    %cst_48 = arith.constant 1.000000e+00 : f32
    %191 = vector.broadcast %cst_48 : f32 to vector<8x128xf32>
    %192 = arith.addf %191, %190 : vector<8x128xf32>
    %193 = arith.divf %191, %192 : vector<8x128xf32>
    %194 = vector.extract_strided_slice %174 {offsets = [0, 256], sizes = [8, 128], strides = [1, 1]} : vector<8x384xf32> to vector<8x128xf32>
    %195 = vector.extract_strided_slice %177 {offsets = [0, 256], sizes = [8, 128], strides = [1, 1]} : vector<8x384xf32> to vector<8x128xf32>
    %196 = arith.mulf %185, %195 : vector<8x128xf32>
    %197 = arith.addf %194, %196 : vector<8x128xf32>
    %198 = math.tanh %197 : vector<8x128xf32>
    %cst_49 = arith.constant 1.000000e+00 : f32
    %199 = vector.broadcast %cst_49 : f32 to vector<8x128xf32>
    %200 = arith.subf %199, %193 : vector<8x128xf32>
    %201 = arith.mulf %200, %198 : vector<8x128xf32>
    %202 = arith.mulf %193, %171 : vector<8x128xf32>
    %203 = arith.addf %201, %202 : vector<8x128xf32>
    %c6_i32 = arith.constant 6 : i32
    %204 = arith.index_cast %c6_i32 : i32 to index
    %c0_50 = arith.constant 0 : index
    %c0_51 = arith.constant 0 : index
    %205 = vector.load %arg9[%204, %c0_50, %c0_51] : memref<8x8x384xf32, #tpu.memory_space<vmem>>, vector<1x8x384xf32>
    %206 = vector.shape_cast %205 : vector<1x8x384xf32> to vector<8x384xf32>
    %cst_52 = arith.constant dense<0.000000e+00> : vector<8x384xf32>
    %207 = tpu.matmul %203, %9, %cst_52 {dimension_numbers = #tpu.dot_dimension_numbers<[1], [0], [0], [1], [0, 0, 1, 1], [], []>} : vector<8x128xf32>, vector<128x384xf32>, vector<8x384xf32> -> vector<8x384xf32>
    %208 = vector.broadcast %10 : vector<1x384xf32> to vector<8x384xf32>
    %209 = arith.addf %207, %208 : vector<8x384xf32>
    %210 = vector.extract_strided_slice %206 {offsets = [0, 0], sizes = [8, 128], strides = [1, 1]} : vector<8x384xf32> to vector<8x128xf32>
    %211 = vector.extract_strided_slice %209 {offsets = [0, 0], sizes = [8, 128], strides = [1, 1]} : vector<8x384xf32> to vector<8x128xf32>
    %212 = arith.addf %210, %211 : vector<8x128xf32>
    %213 = arith.negf %212 : vector<8x128xf32>
    %214 = math.exp %213 : vector<8x128xf32>
    %cst_53 = arith.constant 1.000000e+00 : f32
    %215 = vector.broadcast %cst_53 : f32 to vector<8x128xf32>
    %216 = arith.addf %215, %214 : vector<8x128xf32>
    %217 = arith.divf %215, %216 : vector<8x128xf32>
    %218 = vector.extract_strided_slice %206 {offsets = [0, 128], sizes = [8, 128], strides = [1, 1]} : vector<8x384xf32> to vector<8x128xf32>
    %219 = vector.extract_strided_slice %209 {offsets = [0, 128], sizes = [8, 128], strides = [1, 1]} : vector<8x384xf32> to vector<8x128xf32>
    %220 = arith.addf %218, %219 : vector<8x128xf32>
    %221 = arith.negf %220 : vector<8x128xf32>
    %222 = math.exp %221 : vector<8x128xf32>
    %cst_54 = arith.constant 1.000000e+00 : f32
    %223 = vector.broadcast %cst_54 : f32 to vector<8x128xf32>
    %224 = arith.addf %223, %222 : vector<8x128xf32>
    %225 = arith.divf %223, %224 : vector<8x128xf32>
    %226 = vector.extract_strided_slice %206 {offsets = [0, 256], sizes = [8, 128], strides = [1, 1]} : vector<8x384xf32> to vector<8x128xf32>
    %227 = vector.extract_strided_slice %209 {offsets = [0, 256], sizes = [8, 128], strides = [1, 1]} : vector<8x384xf32> to vector<8x128xf32>
    %228 = arith.mulf %217, %227 : vector<8x128xf32>
    %229 = arith.addf %226, %228 : vector<8x128xf32>
    %230 = math.tanh %229 : vector<8x128xf32>
    %cst_55 = arith.constant 1.000000e+00 : f32
    %231 = vector.broadcast %cst_55 : f32 to vector<8x128xf32>
    %232 = arith.subf %231, %225 : vector<8x128xf32>
    %233 = arith.mulf %232, %230 : vector<8x128xf32>
    %234 = arith.mulf %225, %203 : vector<8x128xf32>
    %235 = arith.addf %233, %234 : vector<8x128xf32>
    %c7_i32 = arith.constant 7 : i32
    %236 = arith.index_cast %c7_i32 : i32 to index
    %c0_56 = arith.constant 0 : index
    %c0_57 = arith.constant 0 : index
    %237 = vector.load %arg9[%236, %c0_56, %c0_57] : memref<8x8x384xf32, #tpu.memory_space<vmem>>, vector<1x8x384xf32>
    %238 = vector.shape_cast %237 : vector<1x8x384xf32> to vector<8x384xf32>
    %cst_58 = arith.constant dense<0.000000e+00> : vector<8x384xf32>
    %239 = tpu.matmul %235, %9, %cst_58 {dimension_numbers = #tpu.dot_dimension_numbers<[1], [0], [0], [1], [0, 0, 1, 1], [], []>} : vector<8x128xf32>, vector<128x384xf32>, vector<8x384xf32> -> vector<8x384xf32>
    %240 = vector.broadcast %10 : vector<1x384xf32> to vector<8x384xf32>
    %241 = arith.addf %239, %240 : vector<8x384xf32>
    %242 = vector.extract_strided_slice %238 {offsets = [0, 0], sizes = [8, 128], strides = [1, 1]} : vector<8x384xf32> to vector<8x128xf32>
    %243 = vector.extract_strided_slice %241 {offsets = [0, 0], sizes = [8, 128], strides = [1, 1]} : vector<8x384xf32> to vector<8x128xf32>
    %244 = arith.addf %242, %243 : vector<8x128xf32>
    %245 = arith.negf %244 : vector<8x128xf32>
    %246 = math.exp %245 : vector<8x128xf32>
    %cst_59 = arith.constant 1.000000e+00 : f32
    %247 = vector.broadcast %cst_59 : f32 to vector<8x128xf32>
    %248 = arith.addf %247, %246 : vector<8x128xf32>
    %249 = arith.divf %247, %248 : vector<8x128xf32>
    %250 = vector.extract_strided_slice %238 {offsets = [0, 128], sizes = [8, 128], strides = [1, 1]} : vector<8x384xf32> to vector<8x128xf32>
    %251 = vector.extract_strided_slice %241 {offsets = [0, 128], sizes = [8, 128], strides = [1, 1]} : vector<8x384xf32> to vector<8x128xf32>
    %252 = arith.addf %250, %251 : vector<8x128xf32>
    %253 = arith.negf %252 : vector<8x128xf32>
    %254 = math.exp %253 : vector<8x128xf32>
    %cst_60 = arith.constant 1.000000e+00 : f32
    %255 = vector.broadcast %cst_60 : f32 to vector<8x128xf32>
    %256 = arith.addf %255, %254 : vector<8x128xf32>
    %257 = arith.divf %255, %256 : vector<8x128xf32>
    %258 = vector.extract_strided_slice %238 {offsets = [0, 256], sizes = [8, 128], strides = [1, 1]} : vector<8x384xf32> to vector<8x128xf32>
    %259 = vector.extract_strided_slice %241 {offsets = [0, 256], sizes = [8, 128], strides = [1, 1]} : vector<8x384xf32> to vector<8x128xf32>
    %260 = arith.mulf %249, %259 : vector<8x128xf32>
    %261 = arith.addf %258, %260 : vector<8x128xf32>
    %262 = math.tanh %261 : vector<8x128xf32>
    %cst_61 = arith.constant 1.000000e+00 : f32
    %263 = vector.broadcast %cst_61 : f32 to vector<8x128xf32>
    %264 = arith.subf %263, %257 : vector<8x128xf32>
    %265 = arith.mulf %264, %262 : vector<8x128xf32>
    %266 = arith.mulf %257, %235 : vector<8x128xf32>
    %267 = arith.addf %265, %266 : vector<8x128xf32>
    %c8_i32 = arith.constant 8 : i32
    %c0_62 = arith.constant 0 : index
    %c0_63 = arith.constant 0 : index
    %268 = vector.load %arg6[%c0_62, %c0_63] : memref<128x128xf32, #tpu.memory_space<vmem>>, vector<128x128xf32>
    %cst_64 = arith.constant dense<0.000000e+00> : vector<8x128xf32>
    %269 = tpu.matmul %267, %268, %cst_64 {dimension_numbers = #tpu.dot_dimension_numbers<[1], [0], [0], [1], [0, 0, 1, 1], [], []>} : vector<8x128xf32>, vector<128x128xf32>, vector<8x128xf32> -> vector<8x128xf32>
    %c0_65 = arith.constant 0 : index
    %c0_66 = arith.constant 0 : index
    %270 = vector.load %arg7[%c0_65, %c0_66] : memref<1x128xf32, #tpu.memory_space<vmem>>, vector<1x128xf32>
    %271 = vector.broadcast %270 : vector<1x128xf32> to vector<8x128xf32>
    %272 = arith.addf %269, %271 : vector<8x128xf32>
    %c0_67 = arith.constant 0 : index
    %c0_68 = arith.constant 0 : index
    %273 = vector.load %arg8[%c0_67, %c0_68] : memref<8x128xf32, #tpu.memory_space<vmem>>, vector<8x128xf32>
    tpu.vector_store %arg8[%c0_67, %c0_68], %272 {strides = array<i32>} : memref<8x128xf32, #tpu.memory_space<vmem>>, vector<8x128xf32>,
    return
  }
  func.func @transform_0(%arg0: i32) -> (i32, i32, i32) {
    %c0_i32 = arith.constant 0 : i32
    %c0_i32_0 = arith.constant 0 : i32
    %c0_i32_1 = arith.constant 0 : i32
    return %c0_i32, %arg0, %c0_i32_0 : i32, i32, i32
  }
  func.func @transform_1(%arg0: i32) -> (i32, i32) {
    %c0_i32 = arith.constant 0 : i32
    %c0_i32_0 = arith.constant 0 : i32
    %c0_i32_1 = arith.constant 0 : i32
    return %c0_i32, %c0_i32_0 : i32, i32
  }
  func.func @transform_2(%arg0: i32) -> (i32, i32) {
    %c0_i32 = arith.constant 0 : i32
    %c0_i32_0 = arith.constant 0 : i32
    %c0_i32_1 = arith.constant 0 : i32
    return %c0_i32, %c0_i32_0 : i32, i32
  }
  func.func @transform_3(%arg0: i32) -> (i32, i32) {
    %c0_i32 = arith.constant 0 : i32
    %c0_i32_0 = arith.constant 0 : i32
    %c0_i32_1 = arith.constant 0 : i32
    return %c0_i32, %c0_i32_0 : i32, i32
  }
  func.func @transform_4(%arg0: i32) -> (i32, i32) {
    %c0_i32 = arith.constant 0 : i32
    %c0_i32_0 = arith.constant 0 : i32
    %c0_i32_1 = arith.constant 0 : i32
    return %c0_i32, %c0_i32_0 : i32, i32
  }
  func.func @transform_5(%arg0: i32) -> (i32, i32) {
    %c0_i32 = arith.constant 0 : i32
    %c0_i32_0 = arith.constant 0 : i32
    %c0_i32_1 = arith.constant 0 : i32
    return %c0_i32, %c0_i32_0 : i32, i32
  }
  func.func @transform_6(%arg0: i32) -> (i32, i32) {
    %c0_i32 = arith.constant 0 : i32
    %c0_i32_0 = arith.constant 0 : i32
    %c0_i32_1 = arith.constant 0 : i32
    return %c0_i32, %c0_i32_0 : i32, i32
  }
  func.func @transform_7(%arg0: i32) -> (i32, i32) {
    %c0_i32 = arith.constant 0 : i32
    %c0_i32_0 = arith.constant 0 : i32
    return %arg0, %c0_i32 : i32, i32
  }
}

</mosaic_0001>

<llo_original>
// kernel: tpu_custom_call.1
$region0: #{tpu_custom_call.1}
  #allocation0 [shape = 'u32[]', space=smem, size = 0x4, offset = 0x4, fixed_abs, tag = 'smem constant byte address 0x4 - core index']
  #allocation1 [shape = 'u32[144,128]{1,0:T(1,128)}', space=vmem, size = 0x12000, scoped, tag = 'internal scratch']
  #allocation2 [shape = 'f32[8,8,384]{2,1,0:T(8,128)}', space=vmem, size = 0x18000, scoped, tag = 'scratch operand']
  %s0 = inlined_call_operand.hbm [shape: bf16[8,8,16], index: 0, kind: input, shape index: {}]
  %s1 = inlined_call_operand.hbm [shape: bf16[16,384], index: 1, kind: input, shape index: {}]
  %s2 = inlined_call_operand.hbm [shape: f32[128,384], index: 2, kind: input, shape index: {}]
  %s3 = inlined_call_operand.vmem [shape: f32[1,384], index: 3, kind: input, shape index: {}]
  %s4 = inlined_call_operand.vmem [shape: f32[1,384], index: 4, kind: input, shape index: {}]
  %s5 = inlined_call_operand.hbm [shape: f32[128,128], index: 5, kind: input, shape index: {}]
  %s6 = inlined_call_operand.vmem [shape: f32[1,128], index: 6, kind: input, shape index: {}]
  %s7 = inlined_call_operand.hbm [shape: f32[8,128], index: 7, kind: output, shape index: {}]
  %s8 = sld [smem:[#allocation0]]
  $region54: #{tpu_custom_call.1} parent=0
    _
  %s10 = ssub.s32 1, %s8
  %s11 = scalar_select 0, %s10, %s8
  $region1: #{tpu_custom_call.1} parent=0
    #allocation3 [shape = 'u8[16384]{0}', space=vmem, size = 0x4000, scoped, tag = 'input window, operand 0, single buffered']
    #allocation4 [shape = 's32[1]{0}', space=sflag, size = 0x4, scoped, tag = 'scoped memory for tpu_custom_call.1']
    #allocation5 [shape = 's32[1]{0}', space=sflag, size = 0x4, scoped, tag = 'scoped memory for tpu_custom_call.1']
    #allocation6 [shape = 'u8[12288]{0}', space=vmem, size = 0x3000, scoped, tag = 'input window, operand 1, single buffered']
    #allocation7 [shape = 's32[1]{0}', space=sflag, size = 0x4, scoped, tag = 'scoped memory for tpu_custom_call.1']
    #allocation8 [shape = 'u8[196608]{0}', space=vmem, size = 0x30000, scoped, tag = 'input window, operand 2, single buffered']
    #allocation9 [shape = 'u8[65536]{0}', space=vmem, size = 0x10000, scoped, tag = 'input window, operand 5, single buffered']
    #allocation10 [shape = 's32[1]{0}', space=sflag, size = 0x4, scoped, tag = 'scoped memory for tpu_custom_call.1']
    #allocation11 [shape = 'u8[4096]{0}', space=vmem, size = 0x1000, scoped, tag = 'output window, operand 0, single buffered']
    %12 = vsyncpa [#allocation4], 0
    %13 = vsyncpa [#allocation7], 0
    %14 = vsyncpa [#allocation10], 0
    %15 = vsyncpa [#allocation5], 0
    // Predicated region
    $region2: #{tpu_custom_call.1} parent=1 // pred_check
      _
    $region3: #{tpu_custom_call.1} parent=1 // pred_check_branch
      %17 = sbr.rel (0) target = $region5
    $region4: #{tpu_custom_call.1} parent=1 // pred_region
      %s19 = ssub.s32 512, 512
      %20 = vsyncadd [#allocation4], %s19
      %s21 = sshll.u32 [#allocation3], 4
      %s22 = int_to_ptr.vmem [resolvable:$true] %s21
      %27 = dma.hbm_to_vmem [thread:$0]  %s0, 512, %s22, [#allocation4], 64, 64, 4
    $region5: #{tpu_custom_call.1} parent=1 // pred_fallthru
      _
    // Predicated region
    $region6: #{tpu_custom_call.1} parent=1 // pred_check
      _
    $region7: #{tpu_custom_call.1} parent=1 // pred_check_branch
      %29 = sbr.rel (0) target = $region9
    $region8: #{tpu_custom_call.1} parent=1 // pred_region
      %s31 = ssub.s32 384, 384
      %32 = vsyncadd [#allocation7], %s31
      %s33 = sshll.u32 [#allocation6], 4
      %s34 = int_to_ptr.vmem [resolvable:$true] %s33
      %39 = dma.hbm_to_vmem [thread:$0]  %s1, 384, %s34, [#allocation7], 192, 192, 12
    $region9: #{tpu_custom_call.1} parent=1 // pred_fallthru
      _
    // Predicated region
    $region10: #{tpu_custom_call.1} parent=1 // pred_check
      _
    $region11: #{tpu_custom_call.1} parent=1 // pred_check_branch
      %41 = sbr.rel (0) target = $region13
    $region12: #{tpu_custom_call.1} parent=1 // pred_region
      %s43 = ssub.s32 6144, 6144
      %44 = vsyncadd [#allocation7], %s43
      %s45 = sshll.u32 [#allocation8], 4
      %s46 = int_to_ptr.vmem [resolvable:$true] %s45
      %51 = dma.hbm_to_vmem [thread:$0]  %s2, 6144, %s46, [#allocation7], 384, 384, 24
    $region13: #{tpu_custom_call.1} parent=1 // pred_fallthru
      _
    // Predicated region
    $region14: #{tpu_custom_call.1} parent=1 // pred_check
      _
    $region15: #{tpu_custom_call.1} parent=1 // pred_check_branch
      %53 = sbr.rel (0) target = $region17
    $region16: #{tpu_custom_call.1} parent=1 // pred_region
      _
    $region17: #{tpu_custom_call.1} parent=1 // pred_fallthru
      _
    // Predicated region
    $region18: #{tpu_custom_call.1} parent=1 // pred_check
      _
    $region19: #{tpu_custom_call.1} parent=1 // pred_check_branch
      %55 = sbr.rel (0) target = $region21
    $region20: #{tpu_custom_call.1} parent=1 // pred_region
      _
    $region21: #{tpu_custom_call.1} parent=1 // pred_fallthru
      _
    // Predicated region
    $region22: #{tpu_custom_call.1} parent=1 // pred_check
      _
    $region23: #{tpu_custom_call.1} parent=1 // pred_check_branch
      %57 = sbr.rel (0) target = $region25
    $region24: #{tpu_custom_call.1} parent=1 // pred_region
      %s59 = ssub.s32 2048, 2048
      %60 = vsyncadd [#allocation10], %s59
      %s61 = sshll.u32 [#allocation9], 4
      %s62 = int_to_ptr.vmem [resolvable:$true] %s61
      %67 = dma.hbm_to_vmem [thread:$0]  %s5, 2048, %s62, [#allocation10], 128, 128, 8
    $region25: #{tpu_custom_call.1} parent=1 // pred_fallthru
      _
    // Predicated region
    $region26: #{tpu_custom_call.1} parent=1 // pred_check
      _
    $region27: #{tpu_custom_call.1} parent=1 // pred_check_branch
      %69 = sbr.rel (0) target = $region29
    $region28: #{tpu_custom_call.1} parent=1 // pred_region
      _
    $region29: #{tpu_custom_call.1} parent=1 // pred_fallthru
      _
    // Predicated region
    $region30: #{tpu_custom_call.1} parent=1 // pred_check
      _
    $region31: #{tpu_custom_call.1} parent=1 // pred_check_branch
      %71 = sbr.rel (0) target = $region33
    $region32: #{tpu_custom_call.1} parent=1 // pred_region
      %72 = dma.done [#allocation4], 512
    $region33: #{tpu_custom_call.1} parent=1 // pred_fallthru
      _
    // Predicated region
    $region34: #{tpu_custom_call.1} parent=1 // pred_check
      _
    $region35: #{tpu_custom_call.1} parent=1 // pred_check_branch
      %74 = sbr.rel (0) target = $region37
    $region36: #{tpu_custom_call.1} parent=1 // pred_region
      %75 = dma.done [#allocation7], 384
    $region37: #{tpu_custom_call.1} parent=1 // pred_fallthru
      _
    // Predicated region
    $region38: #{tpu_custom_call.1} parent=1 // pred_check
      _
    $region39: #{tpu_custom_call.1} parent=1 // pred_check_branch
      %77 = sbr.rel (0) target = $region41
    $region40: #{tpu_custom_call.1} parent=1 // pred_region
      %78 = dma.done [#allocation7], 6144
    $region41: #{tpu_custom_call.1} parent=1 // pred_fallthru
      _
    // Predicated region
    $region42: #{tpu_custom_call.1} parent=1 // pred_check
      _
    $region43: #{tpu_custom_call.1} parent=1 // pred_check_branch
      %80 = sbr.rel (0) target = $region45
    $region44: #{tpu_custom_call.1} parent=1 // pred_region
      %81 = dma.done [#allocation10], 2048
    $region45: #{tpu_custom_call.1} parent=1 // pred_fallthru
      _
    %v83 = vld [vmem:[#allocation3] sm:$0xf]
    %v84 = vld [vmem:[#allocation3 + $0x4] sm:$0xf]
    %v85 = vld [vmem:[#allocation3 + $0x8] sm:$0xf]
    %v86 = vld [vmem:[#allocation3 + $0xc] sm:$0xf]
    %v87 = vld [vmem:[#allocation3 + $0x10] sm:$0xf]
    %v88 = vld [vmem:[#allocation3 + $0x14] sm:$0xf]
    %v89 = vld [vmem:[#allocation3 + $0x18] sm:$0xf]
    %v90 = vld [vmem:[#allocation3 + $0x1c] sm:$0xf]
    %v91 = vld [vmem:[#allocation6] sm:$0xff]
    %v92 = vld [vmem:[#allocation6 + $0x8] sm:$0xf]
    %v93 = vld [vmem:[#allocation6 + $0xc] sm:$0xff]
    %v94 = vld [vmem:[#allocation6 + $0x14] sm:$0xf]
    %v95 = vld [vmem:[%s3] sm:$0x7]
    %v97 = vlaneseq
    %v98 = vshrl.u32 %v97, 7
    %v99 = vsub.s32 0, %v98
    %v100 = vrot.slane %v95, %v99
    %v101 = vlaneseq
    %v102 = vshrl.u32 %v101, 7
    %v103 = vsub.s32 1, %v102
    %v104 = vrot.slane %v95, %v103
    %v105 = vlaneseq
    %v106 = vshrl.u32 %v105, 7
    %v107 = vsub.s32 2, %v106
    %v108 = vrot.slane %v95, %v107
    %v120 = vunpack.c.l.b16 %v83
    %v121 = vunpack.c.l.b16 %v84
    %v122 = vunpack.c.l.b16 %v85
    %v123 = vunpack.c.l.b16 %v86
    %v124 = vunpack.c.l.b16 %v87
    %v125 = vunpack.c.l.b16 %v88
    %v126 = vunpack.c.l.b16 %v89
    %v127 = vunpack.c.l.b16 %v90
    %v128 = vpack.c.b16 %v121, %v120
    %v129 = vpack.c.b16 %v123, %v122
    %v130 = vpack.c.b16 %v125, %v124
    %v131 = vpack.c.b16 %v127, %v126
    %v136 = vunpack.c.l.b16 %v91
    %v137 = vunpack.c.h.b16 %v91
    %v138 = vunpack.c.l.b16 %v92
    %v139 = vunpack.c.l.b16 %v93
    %v140 = vunpack.c.h.b16 %v93
    %v141 = vunpack.c.l.b16 %v94
    %v142 = vpack.c.b16 %v139, %v136
    %v143 = vpack.c.b16 %v140, %v137
    %v144 = vpack.c.b16 %v141, %v138
    %vm148 = vcmask 130048
    %v150 = vsel %vm148, %v128, 0
    %v153 = vsel %vm148, %v129, 0
    %v156 = vsel %vm148, %v130, 0
    %v159 = vsel %vm148, %v131, 0
    %161 = vmatprep.subr.bf16.mxu0 0
    %162 = vmatpush1.bf16.msra.mxu0 0
    %163 = vmatprep.subr.bf16.mxu0 0
    %164 = vmatpush1.bf16.msra.mxu0 0
    %165 = vmatprep.subr.bf16.mxu0 0
    %166 = vmatpush1.bf16.msra.mxu0 0
    %167 = vmatprep.subr.bf16.mxu0 0
    %168 = vmatpush1.bf16.msra.mxu0 0
    %169 = vmatprep.subr.bf16.mxu0 0
    %170 = vmatpush1.bf16.msra.mxu0 0
    %171 = vmatprep.subr.bf16.mxu0 0
    %172 = vmatpush1.bf16.msra.mxu0 0
    %173 = vmatprep.subr.bf16.mxu0 0
    %174 = vmatpush1.bf16.msra.mxu0 0
    %175 = vmatprep.subr.bf16.mxu0 %v143
    %176 = vmatpush1.bf16.msra.mxu0 %v142
    %177 = vmatprep.subr.bf16.mxu0 0
    %178 = vmatpush2.bf16.msra.mxu0 0
    %179 = vmatprep.subr.bf16.mxu0 0
    %180 = vmatpush2.bf16.msra.mxu0 0
    %181 = vmatprep.subr.bf16.mxu0 0
    %182 = vmatpush2.bf16.msra.mxu0 0
    %183 = vmatprep.subr.bf16.mxu0 0
    %184 = vmatpush2.bf16.msra.mxu0 0
    %185 = vmatprep.subr.bf16.mxu0 0
    %186 = vmatpush2.bf16.msra.mxu0 0
    %187 = vmatprep.subr.bf16.mxu0 0
    %188 = vmatpush2.bf16.msra.mxu0 0
    %189 = vmatprep.subr.bf16.mxu0 0
    %190 = vmatpush2.bf16.msra.mxu0 0
    %191 = vmatprep.subr.bf16.mxu0 0
    %192 = vmatpush2.bf16.msra.mxu0 0
    %193 = vmatprep.mubr.bf16.mxu0 0
    %194 = vmatmul.mubr.bf16.gmra.mxu0 %v150
    %v195 = vpop.f32.mrf.mxu0
    %v196 = vadd.f32 %v100, %v195
    %v197 = vpop.f32.mrf.mxu0
    %v198 = vadd.f32 %v104, %v197
    %v199 = vpop.f32.mrf.mxu0
    %v200 = vadd.f32 %v100, %v199
    %v201 = vpop.f32.mrf.mxu0
    %v202 = vadd.f32 %v104, %v201
    %203 = vmatprep.mubr.bf16.mxu0 0
    %204 = vmatmul.mubr.bf16.gmra.mxu0 %v153
    %v205 = vpop.f32.mrf.mxu0
    %v206 = vadd.f32 %v100, %v205
    %v207 = vpop.f32.mrf.mxu0
    %v208 = vadd.f32 %v104, %v207
    %v209 = vpop.f32.mrf.mxu0
    %v210 = vadd.f32 %v100, %v209
    %v211 = vpop.f32.mrf.mxu0
    %v212 = vadd.f32 %v104, %v211
    %213 = vmatprep.mubr.bf16.mxu0 0
    %214 = vmatmul.mubr.bf16.gmra.mxu0 %v156
    %v215 = vpop.f32.mrf.mxu0
    %v216 = vadd.f32 %v100, %v215
    %v217 = vpop.f32.mrf.mxu0
    %v218 = vadd.f32 %v104, %v217
    %v219 = vpop.f32.mrf.mxu0
    %v220 = vadd.f32 %v100, %v219
    %v221 = vpop.f32.mrf.mxu0
    %v222 = vadd.f32 %v104, %v221
    %223 = vmatprep.mubr.bf16.mxu0 0
    %224 = vmatmul.mubr.bf16.gmra.mxu0 %v159
    %v225 = vpop.f32.mrf.mxu0
    %v226 = vadd.f32 %v100, %v225
    %v227 = vpop.f32.mrf.mxu0
    %v228 = vadd.f32 %v104, %v227
    %v229 = vpop.f32.mrf.mxu0
    %v230 = vadd.f32 %v100, %v229
    %v231 = vpop.f32.mrf.mxu0
    %v232 = vadd.f32 %v104, %v231
    %233 = vdwg.mxu0
    %234 = vmatprep.subr.bf16.mxu0 0
    %235 = vmatpush1.bf16.msra.mxu0 0
    %236 = vmatprep.subr.bf16.mxu0 0
    %237 = vmatpush1.bf16.msra.mxu0 0
    %238 = vmatprep.subr.bf16.mxu0 0
    %239 = vmatpush1.bf16.msra.mxu0 0
    %240 = vmatprep.subr.bf16.mxu0 0
    %241 = vmatpush1.bf16.msra.mxu0 0
    %242 = vmatprep.subr.bf16.mxu0 0
    %243 = vmatpush1.bf16.msra.mxu0 0
    %244 = vmatprep.subr.bf16.mxu0 0
    %245 = vmatpush1.bf16.msra.mxu0 0
    %246 = vmatprep.subr.bf16.mxu0 0
    %247 = vmatpush1.bf16.msra.mxu0 0
    %248 = vmatprep.subr.bf16.mxu0 0
    %249 = vmatpush1.bf16.msra.mxu0 %v144
    %250 = vmatprep.subr.bf16.mxu0 0
    %251 = vmatpush2.bf16.msra.mxu0 0
    %252 = vmatprep.subr.bf16.mxu0 0
    %253 = vmatpush2.bf16.msra.mxu0 0
    %254 = vmatprep.subr.bf16.mxu0 0
    %255 = vmatpush2.bf16.msra.mxu0 0
    %256 = vmatprep.subr.bf16.mxu0 0
    %257 = vmatpush2.bf16.msra.mxu0 0
    %258 = vmatprep.subr.bf16.mxu0 0
    %259 = vmatpush2.bf16.msra.mxu0 0
    %260 = vmatprep.subr.bf16.mxu0 0
    %261 = vmatpush2.bf16.msra.mxu0 0
    %262 = vmatprep.subr.bf16.mxu0 0
    %263 = vmatpush2.bf16.msra.mxu0 0
    %264 = vmatprep.subr.bf16.mxu0 0
    %265 = vmatpush2.bf16.msra.mxu0 0
    %266 = vmatprep.mubr.bf16.mxu0 0
    %267 = vmatmul.mubr.bf16.gmra.mxu0 %v150
    %v268 = vpop.f32.mrf.mxu0
    %v269 = vadd.f32 %v108, %v268
    %v270 = vpop.f32.mrf.mxu0
    %v271 = vpop.f32.mrf.mxu0
    %v272 = vadd.f32 %v108, %v271
    %v273 = vpop.f32.mrf.mxu0
    %274 = vmatprep.mubr.bf16.mxu0 0
    %275 = vmatmul.mubr.bf16.gmra.mxu0 %v153
    %v276 = vpop.f32.mrf.mxu0
    %v277 = vadd.f32 %v108, %v276
    %v278 = vpop.f32.mrf.mxu0
    %v279 = vpop.f32.mrf.mxu0
    %v280 = vadd.f32 %v108, %v279
    %v281 = vpop.f32.mrf.mxu0
    %282 = vmatprep.mubr.bf16.mxu0 0
    %283 = vmatmul.mubr.bf16.gmra.mxu0 %v156
    %v284 = vpop.f32.mrf.mxu0
    %v285 = vadd.f32 %v108, %v284
    %v286 = vpop.f32.mrf.mxu0
    %v287 = vpop.f32.mrf.mxu0
    %v288 = vadd.f32 %v108, %v287
    %v289 = vpop.f32.mrf.mxu0
    %290 = vmatprep.mubr.bf16.mxu0 0
    %291 = vmatmul.mubr.bf16.gmra.mxu0 %v159
    %v292 = vpop.f32.mrf.mxu0
    %v293 = vadd.f32 %v108, %v292
    %v294 = vpop.f32.mrf.mxu0
    %v295 = vpop.f32.mrf.mxu0
    %v296 = vadd.f32 %v108, %v295
    %v297 = vpop.f32.mrf.mxu0
    %298 = vdwg.mxu0
    %299 = vst [vmem:[#allocation2] sm:$0xff] %v196
    %300 = vst [vmem:[#allocation2 + $0x8] sm:$0xff] %v198
    %301 = vst [vmem:[#allocation2 + $0x10] sm:$0xff] %v269
    %302 = vst [vmem:[#allocation2 + $0x18] sm:$0xff] %v200
    %303 = vst [vmem:[#allocation2 + $0x20] sm:$0xff] %v202
    %304 = vst [vmem:[#allocation2 + $0x28] sm:$0xff] %v272
    %305 = vst [vmem:[#allocation2 + $0x30] sm:$0xff] %v206
    %306 = vst [vmem:[#allocation2 + $0x38] sm:$0xff] %v208
    %307 = vst [vmem:[#allocation2 + $0x40] sm:$0xff] %v277
    %308 = vst [vmem:[#allocation2 + $0x48] sm:$0xff] %v210
    %309 = vst [vmem:[#allocation2 + $0x50] sm:$0xff] %v212
    %310 = vst [vmem:[#allocation2 + $0x58] sm:$0xff] %v280
    %311 = vst [vmem:[#allocation2 + $0x60] sm:$0xff] %v216
    %312 = vst [vmem:[#allocation2 + $0x68] sm:$0xff] %v218
    %313 = vst [vmem:[#allocation2 + $0x70] sm:$0xff] %v285
    %314 = vst [vmem:[#allocation2 + $0x78] sm:$0xff] %v220
    %315 = vst [vmem:[#allocation2 + $0x80] sm:$0xff] %v222
    %316 = vst [vmem:[#allocation2 + $0x88] sm:$0xff] %v288
    %317 = vst [vmem:[#allocation2 + $0x90] sm:$0xff] %v226
    %318 = vst [vmem:[#allocation2 + $0x98] sm:$0xff] %v228
    %319 = vst [vmem:[#allocation2 + $0xa0] sm:$0xff] %v293
    %320 = vst [vmem:[#allocation2 + $0xa8] sm:$0xff] %v230
    %321 = vst [vmem:[#allocation2 + $0xb0] sm:$0xff] %v232
    %322 = vst [vmem:[#allocation2 + $0xb8] sm:$0xff] %v296
    %v323 = vld [vmem:[#allocation8] sm:$0xff]
    %v324 = vld [vmem:[#allocation8 + $0x8] sm:$0xff]
    %v325 = vld [vmem:[#allocation8 + $0x10] sm:$0xff]
    %v326 = vld [vmem:[#allocation8 + $0x18] sm:$0xff]
    %v327 = vld [vmem:[#allocation8 + $0x20] sm:$0xff]
    %v328 = vld [vmem:[#allocation8 + $0x28] sm:$0xff]
    %v329 = vld [vmem:[#allocation8 + $0x30] sm:$0xff]
    %v330 = vld [vmem:[#allocation8 + $0x38] sm:$0xff]
    %v331 = vld [vmem:[#allocation8 + $0x40] sm:$0xff]
    %v332 = vld [vmem:[#allocation8 + $0x48] sm:$0xff]
    %v333 = vld [vmem:[#allocation8 + $0x50] sm:$0xff]
    %v334 = vld [vmem:[#allocation8 + $0x58] sm:$0xff]
    %v335 = vld [vmem:[#allocation8 + $0x60] sm:$0xff]
    %v336 = vld [vmem:[#allocation8 + $0x68] sm:$0xff]
    %v337 = vld [vmem:[#allocation8 + $0x70] sm:$0xff]
    %v338 = vld [vmem:[#allocation8 + $0x78] sm:$0xff]
    %v339 = vld [vmem:[#allocation8 + $0x80] sm:$0xff]
    %v340 = vld [vmem:[#allocation8 + $0x88] sm:$0xff]
    %v341 = vld [vmem:[#allocation8 + $0x90] sm:$0xff]
    %v342 = vld [vmem:[#allocation8 + $0x98] sm:$0xff]
    %v343 = vld [vmem:[#allocation8 + $0xa0] sm:$0xff]
    %v344 = vld [vmem:[#allocation8 + $0xa8] sm:$0xff]
    %v345 = vld [vmem:[#allocation8 + $0xb0] sm:$0xff]
    %v346 = vld [vmem:[#allocation8 + $0xb8] sm:$0xff]
    %v347 = vld [vmem:[#allocation8 + $0xc0] sm:$0xff]
    %v348 = vld [vmem:[#allocation8 + $0xc8] sm:$0xff]
    %v349 = vld [vmem:[#allocation8 + $0xd0] sm:$0xff]
    %v350 = vld [vmem:[#allocation8 + $0xd8] sm:$0xff]
    %v351 = vld [vmem:[#allocation8 + $0xe0] sm:$0xff]
    %v352 = vld [vmem:[#allocation8 + $0xe8] sm:$0xff]
    %v353 = vld [vmem:[#allocation8 + $0xf0] sm:$0xff]
    %v354 = vld [vmem:[#allocation8 + $0xf8] sm:$0xff]
    %v355 = vld [vmem:[#allocation8 + $0x100] sm:$0xff]
    %v356 = vld [vmem:[#allocation8 + $0x108] sm:$0xff]
    %v357 = vld [vmem:[#allocation8 + $0x110] sm:$0xff]
    %v358 = vld [vmem:[#allocation8 + $0x118] sm:$0xff]
    %v359 = vld [vmem:[#allocation8 + $0x120] sm:$0xff]
    %v360 = vld [vmem:[#allocation8 + $0x128] sm:$0xff]
    %v361 = vld [vmem:[#allocation8 + $0x130] sm:$0xff]
    %v362 = vld [vmem:[#allocation8 + $0x138] sm:$0xff]
    %v363 = vld [vmem:[#allocation8 + $0x140] sm:$0xff]
    %v364 = vld [vmem:[#allocation8 + $0x148] sm:$0xff]
    %v365 = vld [vmem:[#allocation8 + $0x150] sm:$0xff]
    %v366 = vld [vmem:[#allocation8 + $0x158] sm:$0xff]
    %v367 = vld [vmem:[#allocation8 + $0x160] sm:$0xff]
    %v368 = vld [vmem:[#allocation8 + $0x168] sm:$0xff]
    %v369 = vld [vmem:[#allocation8 + $0x170] sm:$0xff]
    %v370 = vld [vmem:[#allocation8 + $0x178] sm:$0xff]
    %v371 = vld [vmem:[%s4] sm:$0x7]
    %v372 = vld [vmem:[#allocation2] sm:$0xff]
    %v373 = vld [vmem:[#allocation2 + $0x8] sm:$0xff]
    %v374 = vld [vmem:[#allocation2 + $0x10] sm:$0xff]
    %v376 = vlaneseq
    %v377 = vshrl.u32 %v376, 7
    %v378 = vsub.s32 0, %v377
    %v379 = vrot.slane %v371, %v378
    %v380 = vlaneseq
    %v381 = vshrl.u32 %v380, 7
    %v382 = vsub.s32 1, %v381
    %v383 = vrot.slane %v371, %v382
    %v384 = vlaneseq
    %v385 = vshrl.u32 %v384, 7
    %v386 = vsub.s32 2, %v385
    %v387 = vrot.slane %v371, %v386
    %391 = vmatprep.subr.mxu0 %v369
    %392 = vmatpush1.msra.mxu0 %v368
    %393 = vmatprep.subr.mxu0 %v366
    %394 = vmatpush1.msra.mxu0 %v365
    %395 = vmatprep.subr.mxu0 %v363
    %396 = vmatpush1.msra.mxu0 %v362
    %397 = vmatprep.subr.mxu0 %v360
    %398 = vmatpush1.msra.mxu0 %v359
    %399 = vmatprep.subr.mxu0 %v357
    %400 = vmatpush1.msra.mxu0 %v356
    %401 = vmatprep.subr.mxu0 %v354
    %402 = vmatpush1.msra.mxu0 %v353
    %403 = vmatprep.subr.mxu0 %v351
    %404 = vmatpush1.msra.mxu0 %v350
    %405 = vmatprep.subr.mxu0 %v348
    %406 = vmatpush1.msra.mxu0 %v347
    %407 = vmatprep.subr.mxu0 %v345
    %408 = vmatpush1.msra.mxu0 %v344
    %409 = vmatprep.subr.mxu0 %v342
    %410 = vmatpush1.msra.mxu0 %v341
    %411 = vmatprep.subr.mxu0 %v339
    %412 = vmatpush1.msra.mxu0 %v338
    %413 = vmatprep.subr.mxu0 %v336
    %414 = vmatpush1.msra.mxu0 %v335
    %415 = vmatprep.subr.mxu0 %v333
    %416 = vmatpush1.msra.mxu0 %v332
    %417 = vmatprep.subr.mxu0 %v330
    %418 = vmatpush1.msra.mxu0 %v329
    %419 = vmatprep.subr.mxu0 %v327
    %420 = vmatpush1.msra.mxu0 %v326
    %421 = vmatprep.subr.mxu0 %v324
    %422 = vmatpush1.msra.mxu0 %v323
    %423 = vmatprep.subr.mxu0 0.0
    %424 = vmatpush2.msra.mxu0 0.0
    %425 = vmatprep.subr.mxu0 0.0
    %426 = vmatpush2.msra.mxu0 0.0
    %427 = vmatprep.subr.mxu0 0.0
    %428 = vmatpush2.msra.mxu0 0.0
    %429 = vmatprep.subr.mxu0 0.0
    %430 = vmatpush2.msra.mxu0 0.0
    %431 = vmatprep.subr.mxu0 0.0
    %432 = vmatpush2.msra.mxu0 0.0
    %433 = vmatprep.subr.mxu0 0.0
    %434 = vmatpush2.msra.mxu0 0.0
    %435 = vmatprep.subr.mxu0 0.0
    %436 = vmatpush2.msra.mxu0 0.0
    %437 = vmatprep.subr.mxu0 0.0
    %438 = vmatpush2.msra.mxu0 0.0
    %439 = vmatprep.subr.mxu0 0.0
    %440 = vmatpush2.msra.mxu0 0.0
    %441 = vmatprep.subr.mxu0 0.0
    %442 = vmatpush2.msra.mxu0 0.0
    %443 = vmatprep.subr.mxu0 0.0
    %444 = vmatpush2.msra.mxu0 0.0
    %445 = vmatprep.subr.mxu0 0.0
    %446 = vmatpush2.msra.mxu0 0.0
    %447 = vmatprep.subr.mxu0 0.0
    %448 = vmatpush2.msra.mxu0 0.0
    %449 = vmatprep.subr.mxu0 0.0
    %450 = vmatpush2.msra.mxu0 0.0
    %451 = vmatprep.subr.mxu0 0.0
    %452 = vmatpush2.msra.mxu0 0.0
    %453 = vmatprep.subr.mxu0 0.0
    %454 = vmatpush2.msra.mxu0 0.0
    %455 = vmatprep.mubr.f32.mxu0 0.0
    %456 = vmatmul.mubr.f32.gmra.mxu0 0.0
    %v457 = vpop.f32.mrf.mxu0
    %v458 = vadd.f32 %v379, %v457
    %v459 = vpop.f32.mrf.mxu0
    %v460 = vadd.f32 %v383, %v459
    %461 = vdwg.mxu0
    %462 = vmatprep.subr.mxu0 0.0
    %463 = vmatpush1.msra.mxu0 %v370
    %464 = vmatprep.subr.mxu0 0.0
    %465 = vmatpush1.msra.mxu0 %v367
    %466 = vmatprep.subr.mxu0 0.0
    %467 = vmatpush1.msra.mxu0 %v364
    %468 = vmatprep.subr.mxu0 0.0
    %469 = vmatpush1.msra.mxu0 %v361
    %470 = vmatprep.subr.mxu0 0.0
    %471 = vmatpush1.msra.mxu0 %v358
    %472 = vmatprep.subr.mxu0 0.0
    %473 = vmatpush1.msra.mxu0 %v355
    %474 = vmatprep.subr.mxu0 0.0
    %475 = vmatpush1.msra.mxu0 %v352
    %476 = vmatprep.subr.mxu0 0.0
    %477 = vmatpush1.msra.mxu0 %v349
    %478 = vmatprep.subr.mxu0 0.0
    %479 = vmatpush1.msra.mxu0 %v346
    %480 = vmatprep.subr.mxu0 0.0
    %481 = vmatpush1.msra.mxu0 %v343
    %482 = vmatprep.subr.mxu0 0.0
    %483 = vmatpush1.msra.mxu0 %v340
    %484 = vmatprep.subr.mxu0 0.0
    %485 = vmatpush1.msra.mxu0 %v337
    %486 = vmatprep.subr.mxu0 0.0
    %487 = vmatpush1.msra.mxu0 %v334
    %488 = vmatprep.subr.mxu0 0.0
    %489 = vmatpush1.msra.mxu0 %v331
    %490 = vmatprep.subr.mxu0 0.0
    %491 = vmatpush1.msra.mxu0 %v328
    %492 = vmatprep.subr.mxu0 0.0
    %493 = vmatpush1.msra.mxu0 %v325
    %494 = vmatprep.subr.mxu0 0.0
    %495 = vmatpush2.msra.mxu0 0.0
    %496 = vmatprep.subr.mxu0 0.0
    %497 = vmatpush2.msra.mxu0 0.0
    %498 = vmatprep.subr.mxu0 0.0
    %499 = vmatpush2.msra.mxu0 0.0
    %500 = vmatprep.subr.mxu0 0.0
    %501 = vmatpush2.msra.mxu0 0.0
    %502 = vmatprep.subr.mxu0 0.0
    %503 = vmatpush2.msra.mxu0 0.0
    %504 = vmatprep.subr.mxu0 0.0
    %505 = vmatpush2.msra.mxu0 0.0
    %506 = vmatprep.subr.mxu0 0.0
    %507 = vmatpush2.msra.mxu0 0.0
    %508 = vmatprep.subr.mxu0 0.0
    %509 = vmatpush2.msra.mxu0 0.0
    %510 = vmatprep.subr.mxu0 0.0
    %511 = vmatpush2.msra.mxu0 0.0
    %512 = vmatprep.subr.mxu0 0.0
    %513 = vmatpush2.msra.mxu0 0.0
    %514 = vmatprep.subr.mxu0 0.0
    %515 = vmatpush2.msra.mxu0 0.0
    %516 = vmatprep.subr.mxu0 0.0
    %517 = vmatpush2.msra.mxu0 0.0
    %518 = vmatprep.subr.mxu0 0.0
    %519 = vmatpush2.msra.mxu0 0.0
    %520 = vmatprep.subr.mxu0 0.0
    %521 = vmatpush2.msra.mxu0 0.0
    %522 = vmatprep.subr.mxu0 0.0
    %523 = vmatpush2.msra.mxu0 0.0
    %524 = vmatprep.subr.mxu0 0.0
    %525 = vmatpush2.msra.mxu0 0.0
    %526 = vmatprep.mubr.f32.mxu0 0.0
    %527 = vmatmul.mubr.f32.gmra.mxu0 0.0
    %v528 = vpop.f32.mrf.mxu0
    %v529 = vadd.f32 %v387, %v528
    %v530 = vpop.f32.mrf.mxu0
    %531 = vdwg.mxu0
    %v532 = vadd.f32 %v372, %v458
    %v533 = vxor.u32 %v532, 2147483648
    %v534 = vmul.f32 %v533, 1.442695
    %v535 = vpow.pop %v534
    %v536 = vadd.f32 %v535, 1.0
    %v537 = vrcp.pop %v536
    %v538 = vmul.f32 1.0, %v537
    %v539 = vadd.f32 %v373, %v460
    %v540 = vxor.u32 %v539, 2147483648
    %v541 = vmul.f32 %v540, 1.442695
    %v542 = vpow.pop %v541
    %v543 = vadd.f32 %v542, 1.0
    %v544 = vrcp.pop %v543
    %v545 = vmul.f32 1.0, %v544
    %v546 = vmul.f32 %v538, %v529
    %v547 = vadd.f32 %v374, %v546
    %v548 = vtanh.pop %v547
    %v549 = vsub.f32 1.0, %v545
    %v550 = vmul.f32 %v549, %v548
    %v551 = vmul.f32 %v545, 0.0
    %v552 = vadd.f32 %v550, %v551
    %s553 = scalar_lea.vmem [#allocation2], 24
    %v554 = vld [vmem:[%s553] sm:$0xff]
    %v555 = vld [vmem:[%s553 + $0x8] sm:$0xff]
    %v556 = vld [vmem:[%s553 + $0x10] sm:$0xff]
    %557 = vmatprep.subr.mxu0 %v369
    %558 = vmatpush1.msra.mxu0 %v368
    %559 = vmatprep.subr.mxu0 %v366
    %560 = vmatpush1.msra.mxu0 %v365
    %561 = vmatprep.subr.mxu0 %v363
    %562 = vmatpush1.msra.mxu0 %v362
    %563 = vmatprep.subr.mxu0 %v360
    %564 = vmatpush1.msra.mxu0 %v359
    %565 = vmatprep.subr.mxu0 %v357
    %566 = vmatpush1.msra.mxu0 %v356
    %567 = vmatprep.subr.mxu0 %v354
    %568 = vmatpush1.msra.mxu0 %v353
    %569 = vmatprep.subr.mxu0 %v351
    %570 = vmatpush1.msra.mxu0 %v350
    %571 = vmatprep.subr.mxu0 %v348
    %572 = vmatpush1.msra.mxu0 %v347
    %573 = vmatprep.subr.mxu0 %v345
    %574 = vmatpush1.msra.mxu0 %v344
    %575 = vmatprep.subr.mxu0 %v342
    %576 = vmatpush1.msra.mxu0 %v341
    %577 = vmatprep.subr.mxu0 %v339
    %578 = vmatpush1.msra.mxu0 %v338
    %579 = vmatprep.subr.mxu0 %v336
    %580 = vmatpush1.msra.mxu0 %v335
    %581 = vmatprep.subr.mxu0 %v333
    %582 = vmatpush1.msra.mxu0 %v332
    %583 = vmatprep.subr.mxu0 %v330
    %584 = vmatpush1.msra.mxu0 %v329
    %585 = vmatprep.subr.mxu0 %v327
    %586 = vmatpush1.msra.mxu0 %v326
    %587 = vmatprep.subr.mxu0 %v324
    %588 = vmatpush1.msra.mxu0 %v323
    %589 = vmatprep.subr.mxu0 0.0
    %590 = vmatpush2.msra.mxu0 0.0
    %591 = vmatprep.subr.mxu0 0.0
    %592 = vmatpush2.msra.mxu0 0.0
    %593 = vmatprep.subr.mxu0 0.0
    %594 = vmatpush2.msra.mxu0 0.0
    %595 = vmatprep.subr.mxu0 0.0
    %596 = vmatpush2.msra.mxu0 0.0
    %597 = vmatprep.subr.mxu0 0.0
    %598 = vmatpush2.msra.mxu0 0.0
    %599 = vmatprep.subr.mxu0 0.0
    %600 = vmatpush2.msra.mxu0 0.0
    %601 = vmatprep.subr.mxu0 0.0
    %602 = vmatpush2.msra.mxu0 0.0
    %603 = vmatprep.subr.mxu0 0.0
    %604 = vmatpush2.msra.mxu0 0.0
    %605 = vmatprep.subr.mxu0 0.0
    %606 = vmatpush2.msra.mxu0 0.0
    %607 = vmatprep.subr.mxu0 0.0
    %608 = vmatpush2.msra.mxu0 0.0
    %609 = vmatprep.subr.mxu0 0.0
    %610 = vmatpush2.msra.mxu0 0.0
    %611 = vmatprep.subr.mxu0 0.0
    %612 = vmatpush2.msra.mxu0 0.0
    %613 = vmatprep.subr.mxu0 0.0
    %614 = vmatpush2.msra.mxu0 0.0
    %615 = vmatprep.subr.mxu0 0.0
    %616 = vmatpush2.msra.mxu0 0.0
    %617 = vmatprep.subr.mxu0 0.0
    %618 = vmatpush2.msra.mxu0 0.0
    %619 = vmatprep.subr.mxu0 0.0
    %620 = vmatpush2.msra.mxu0 0.0
    %621 = vmatprep.mubr.f32.mxu0 0.0
    %622 = vmatmul.mubr.f32.gmra.mxu0 %v552
    %v623 = vpop.f32.mrf.mxu0
    %v624 = vadd.f32 %v379, %v623
    %v625 = vpop.f32.mrf.mxu0
    %v626 = vadd.f32 %v383, %v625
    %627 = vdwg.mxu0
    %628 = vmatprep.subr.mxu0 0.0
    %629 = vmatpush1.msra.mxu0 %v370
    %630 = vmatprep.subr.mxu0 0.0
    %631 = vmatpush1.msra.mxu0 %v367
    %632 = vmatprep.subr.mxu0 0.0
    %633 = vmatpush1.msra.mxu0 %v364
    %634 = vmatprep.subr.mxu0 0.0
    %635 = vmatpush1.msra.mxu0 %v361
    %636 = vmatprep.subr.mxu0 0.0
    %637 = vmatpush1.msra.mxu0 %v358
    %638 = vmatprep.subr.mxu0 0.0
    %639 = vmatpush1.msra.mxu0 %v355
    %640 = vmatprep.subr.mxu0 0.0
    %641 = vmatpush1.msra.mxu0 %v352
    %642 = vmatprep.subr.mxu0 0.0
    %643 = vmatpush1.msra.mxu0 %v349
    %644 = vmatprep.subr.mxu0 0.0
    %645 = vmatpush1.msra.mxu0 %v346
    %646 = vmatprep.subr.mxu0 0.0
    %647 = vmatpush1.msra.mxu0 %v343
    %648 = vmatprep.subr.mxu0 0.0
    %649 = vmatpush1.msra.mxu0 %v340
    %650 = vmatprep.subr.mxu0 0.0
    %651 = vmatpush1.msra.mxu0 %v337
    %652 = vmatprep.subr.mxu0 0.0
    %653 = vmatpush1.msra.mxu0 %v334
    %654 = vmatprep.subr.mxu0 0.0
    %655 = vmatpush1.msra.mxu0 %v331
    %656 = vmatprep.subr.mxu0 0.0
    %657 = vmatpush1.msra.mxu0 %v328
    %658 = vmatprep.subr.mxu0 0.0
    %659 = vmatpush1.msra.mxu0 %v325
    %660 = vmatprep.subr.mxu0 0.0
    %661 = vmatpush2.msra.mxu0 0.0
    %662 = vmatprep.subr.mxu0 0.0
    %663 = vmatpush2.msra.mxu0 0.0
    %664 = vmatprep.subr.mxu0 0.0
    %665 = vmatpush2.msra.mxu0 0.0
    %666 = vmatprep.subr.mxu0 0.0
    %667 = vmatpush2.msra.mxu0 0.0
    %668 = vmatprep.subr.mxu0 0.0
    %669 = vmatpush2.msra.mxu0 0.0
    %670 = vmatprep.subr.mxu0 0.0
    %671 = vmatpush2.msra.mxu0 0.0
    %672 = vmatprep.subr.mxu0 0.0
    %673 = vmatpush2.msra.mxu0 0.0
    %674 = vmatprep.subr.mxu0 0.0
    %675 = vmatpush2.msra.mxu0 0.0
    %676 = vmatprep.subr.mxu0 0.0
    %677 = vmatpush2.msra.mxu0 0.0
    %678 = vmatprep.subr.mxu0 0.0
    %679 = vmatpush2.msra.mxu0 0.0
    %680 = vmatprep.subr.mxu0 0.0
    %681 = vmatpush2.msra.mxu0 0.0
    %682 = vmatprep.subr.mxu0 0.0
    %683 = vmatpush2.msra.mxu0 0.0
    %684 = vmatprep.subr.mxu0 0.0
    %685 = vmatpush2.msra.mxu0 0.0
    %686 = vmatprep.subr.mxu0 0.0
    %687 = vmatpush2.msra.mxu0 0.0
    %688 = vmatprep.subr.mxu0 0.0
    %689 = vmatpush2.msra.mxu0 0.0
    %690 = vmatprep.subr.mxu0 0.0
    %691 = vmatpush2.msra.mxu0 0.0
    %692 = vmatprep.mubr.f32.mxu0 0.0
    %693 = vmatmul.mubr.f32.gmra.mxu0 %v552
    %v694 = vpop.f32.mrf.mxu0
    %v695 = vadd.f32 %v387, %v694
    %v696 = vpop.f32.mrf.mxu0
    %697 = vdwg.mxu0
    %v698 = vadd.f32 %v554, %v624
    %v699 = vxor.u32 %v698, 2147483648
    %v700 = vmul.f32 %v699, 1.442695
    %v701 = vpow.pop %v700
    %v702 = vadd.f32 %v701, 1.0
    %v703 = vrcp.pop %v702
    %v704 = vmul.f32 1.0, %v703
    %v705 = vadd.f32 %v555, %v626
    %v706 = vxor.u32 %v705, 2147483648
    %v707 = vmul.f32 %v706, 1.442695
    %v708 = vpow.pop %v707
    %v709 = vadd.f32 %v708, 1.0
    %v710 = vrcp.pop %v709
    %v711 = vmul.f32 1.0, %v710
    %v712 = vmul.f32 %v704, %v695
    %v713 = vadd.f32 %v556, %v712
    %v714 = vtanh.pop %v713
    %v715 = vsub.f32 1.0, %v711
    %v716 = vmul.f32 %v715, %v714
    %v717 = vmul.f32 %v711, %v552
    %v718 = vadd.f32 %v716, %v717
    %s719 = scalar_lea.vmem [#allocation2], 48
    %v720 = vld [vmem:[%s719] sm:$0xff]
    %v721 = vld [vmem:[%s719 + $0x8] sm:$0xff]
    %v722 = vld [vmem:[%s719 + $0x10] sm:$0xff]
    %723 = vmatprep.subr.mxu0 %v369
    %724 = vmatpush1.msra.mxu0 %v368
    %725 = vmatprep.subr.mxu0 %v366
    %726 = vmatpush1.msra.mxu0 %v365
    %727 = vmatprep.subr.mxu0 %v363
    %728 = vmatpush1.msra.mxu0 %v362
    %729 = vmatprep.subr.mxu0 %v360
    %730 = vmatpush1.msra.mxu0 %v359
    %731 = vmatprep.subr.mxu0 %v357
    %732 = vmatpush1.msra.mxu0 %v356
    %733 = vmatprep.subr.mxu0 %v354
    %734 = vmatpush1.msra.mxu0 %v353
    %735 = vmatprep.subr.mxu0 %v351
    %736 = vmatpush1.msra.mxu0 %v350
    %737 = vmatprep.subr.mxu0 %v348
    %738 = vmatpush1.msra.mxu0 %v347
    %739 = vmatprep.subr.mxu0 %v345
    %740 = vmatpush1.msra.mxu0 %v344
    %741 = vmatprep.subr.mxu0 %v342
    %742 = vmatpush1.msra.mxu0 %v341
    %743 = vmatprep.subr.mxu0 %v339
    %744 = vmatpush1.msra.mxu0 %v338
    %745 = vmatprep.subr.mxu0 %v336
    %746 = vmatpush1.msra.mxu0 %v335
    %747 = vmatprep.subr.mxu0 %v333
    %748 = vmatpush1.msra.mxu0 %v332
    %749 = vmatprep.subr.mxu0 %v330
    %750 = vmatpush1.msra.mxu0 %v329
    %751 = vmatprep.subr.mxu0 %v327
    %752 = vmatpush1.msra.mxu0 %v326
    %753 = vmatprep.subr.mxu0 %v324
    %754 = vmatpush1.msra.mxu0 %v323
    %755 = vmatprep.subr.mxu0 0.0
    %756 = vmatpush2.msra.mxu0 0.0
    %757 = vmatprep.subr.mxu0 0.0
    %758 = vmatpush2.msra.mxu0 0.0
    %759 = vmatprep.subr.mxu0 0.0
    %760 = vmatpush2.msra.mxu0 0.0
    %761 = vmatprep.subr.mxu0 0.0
    %762 = vmatpush2.msra.mxu0 0.0
    %763 = vmatprep.subr.mxu0 0.0
    %764 = vmatpush2.msra.mxu0 0.0
    %765 = vmatprep.subr.mxu0 0.0
    %766 = vmatpush2.msra.mxu0 0.0
    %767 = vmatprep.subr.mxu0 0.0
    %768 = vmatpush2.msra.mxu0 0.0
    %769 = vmatprep.subr.mxu0 0.0
    %770 = vmatpush2.msra.mxu0 0.0
    %771 = vmatprep.subr.mxu0 0.0
    %772 = vmatpush2.msra.mxu0 0.0
    %773 = vmatprep.subr.mxu0 0.0
    %774 = vmatpush2.msra.mxu0 0.0
    %775 = vmatprep.subr.mxu0 0.0
    %776 = vmatpush2.msra.mxu0 0.0
    %777 = vmatprep.subr.mxu0 0.0
    %778 = vmatpush2.msra.mxu0 0.0
    %779 = vmatprep.subr.mxu0 0.0
    %780 = vmatpush2.msra.mxu0 0.0
    %781 = vmatprep.subr.mxu0 0.0
    %782 = vmatpush2.msra.mxu0 0.0
    %783 = vmatprep.subr.mxu0 0.0
    %784 = vmatpush2.msra.mxu0 0.0
    %785 = vmatprep.subr.mxu0 0.0
    %786 = vmatpush2.msra.mxu0 0.0
    %787 = vmatprep.mubr.f32.mxu0 0.0
    %788 = vmatmul.mubr.f32.gmra.mxu0 %v718
    %v789 = vpop.f32.mrf.mxu0
    %v790 = vadd.f32 %v379, %v789
    %v791 = vpop.f32.mrf.mxu0
    %v792 = vadd.f32 %v383, %v791
    %793 = vdwg.mxu0
    %794 = vmatprep.subr.mxu0 0.0
    %795 = vmatpush1.msra.mxu0 %v370
    %796 = vmatprep.subr.mxu0 0.0
    %797 = vmatpush1.msra.mxu0 %v367
    %798 = vmatprep.subr.mxu0 0.0
    %799 = vmatpush1.msra.mxu0 %v364
    %800 = vmatprep.subr.mxu0 0.0
    %801 = vmatpush1.msra.mxu0 %v361
    %802 = vmatprep.subr.mxu0 0.0
    %803 = vmatpush1.msra.mxu0 %v358
    %804 = vmatprep.subr.mxu0 0.0
    %805 = vmatpush1.msra.mxu0 %v355
    %806 = vmatprep.subr.mxu0 0.0
    %807 = vmatpush1.msra.mxu0 %v352
    %808 = vmatprep.subr.mxu0 0.0
    %809 = vmatpush1.msra.mxu0 %v349
    %810 = vmatprep.subr.mxu0 0.0
    %811 = vmatpush1.msra.mxu0 %v346
    %812 = vmatprep.subr.mxu0 0.0
    %813 = vmatpush1.msra.mxu0 %v343
    %814 = vmatprep.subr.mxu0 0.0
    %815 = vmatpush1.msra.mxu0 %v340
    %816 = vmatprep.subr.mxu0 0.0
    %817 = vmatpush1.msra.mxu0 %v337
    %818 = vmatprep.subr.mxu0 0.0
    %819 = vmatpush1.msra.mxu0 %v334
    %820 = vmatprep.subr.mxu0 0.0
    %821 = vmatpush1.msra.mxu0 %v331
    %822 = vmatprep.subr.mxu0 0.0
    %823 = vmatpush1.msra.mxu0 %v328
    %824 = vmatprep.subr.mxu0 0.0
    %825 = vmatpush1.msra.mxu0 %v325
    %826 = vmatprep.subr.mxu0 0.0
    %827 = vmatpush2.msra.mxu0 0.0
    %828 = vmatprep.subr.mxu0 0.0
    %829 = vmatpush2.msra.mxu0 0.0
    %830 = vmatprep.subr.mxu0 0.0
    %831 = vmatpush2.msra.mxu0 0.0
    %832 = vmatprep.subr.mxu0 0.0
    %833 = vmatpush2.msra.mxu0 0.0
    %834 = vmatprep.subr.mxu0 0.0
    %835 = vmatpush2.msra.mxu0 0.0
    %836 = vmatprep.subr.mxu0 0.0
    %837 = vmatpush2.msra.mxu0 0.0
    %838 = vmatprep.subr.mxu0 0.0
    %839 = vmatpush2.msra.mxu0 0.0
    %840 = vmatprep.subr.mxu0 0.0
    %841 = vmatpush2.msra.mxu0 0.0
    %842 = vmatprep.subr.mxu0 0.0
    %843 = vmatpush2.msra.mxu0 0.0
    %844 = vmatprep.subr.mxu0 0.0
    %845 = vmatpush2.msra.mxu0 0.0
    %846 = vmatprep.subr.mxu0 0.0
    %847 = vmatpush2.msra.mxu0 0.0
    %848 = vmatprep.subr.mxu0 0.0
    %849 = vmatpush2.msra.mxu0 0.0
    %850 = vmatprep.subr.mxu0 0.0
    %851 = vmatpush2.msra.mxu0 0.0
    %852 = vmatprep.subr.mxu0 0.0
    %853 = vmatpush2.msra.mxu0 0.0
    %854 = vmatprep.subr.mxu0 0.0
    %855 = vmatpush2.msra.mxu0 0.0
    %856 = vmatprep.subr.mxu0 0.0
    %857 = vmatpush2.msra.mxu0 0.0
    %858 = vmatprep.mubr.f32.mxu0 0.0
    %859 = vmatmul.mubr.f32.gmra.mxu0 %v718
    %v860 = vpop.f32.mrf.mxu0
    %v861 = vadd.f32 %v387, %v860
    %v862 = vpop.f32.mrf.mxu0
    %863 = vdwg.mxu0
    %v864 = vadd.f32 %v720, %v790
    %v865 = vxor.u32 %v864, 2147483648
    %v866 = vmul.f32 %v865, 1.442695
    %v867 = vpow.pop %v866
    %v868 = vadd.f32 %v867, 1.0
    %v869 = vrcp.pop %v868
    %v870 = vmul.f32 1.0, %v869
    %v871 = vadd.f32 %v721, %v792
    %v872 = vxor.u32 %v871, 2147483648
    %v873 = vmul.f32 %v872, 1.442695
    %v874 = vpow.pop %v873
    %v875 = vadd.f32 %v874, 1.0
    %v876 = vrcp.pop %v875
    %v877 = vmul.f32 1.0, %v876
    %v878 = vmul.f32 %v870, %v861
    %v879 = vadd.f32 %v722, %v878
    %v880 = vtanh.pop %v879
    %v881 = vsub.f32 1.0, %v877
    %v882 = vmul.f32 %v881, %v880
    %v883 = vmul.f32 %v877, %v718
    %v884 = vadd.f32 %v882, %v883
    %s885 = scalar_lea.vmem [#allocation2], 72
    %v886 = vld [vmem:[%s885] sm:$0xff]
    %v887 = vld [vmem:[%s885 + $0x8] sm:$0xff]
    %v888 = vld [vmem:[%s885 + $0x10] sm:$0xff]
    %889 = vmatprep.subr.mxu0 %v369
    %890 = vmatpush1.msra.mxu0 %v368
    %891 = vmatprep.subr.mxu0 %v366
    %892 = vmatpush1.msra.mxu0 %v365
    %893 = vmatprep.subr.mxu0 %v363
    %894 = vmatpush1.msra.mxu0 %v362
    %895 = vmatprep.subr.mxu0 %v360
    %896 = vmatpush1.msra.mxu0 %v359
    %897 = vmatprep.subr.mxu0 %v357
    %898 = vmatpush1.msra.mxu0 %v356
    %899 = vmatprep.subr.mxu0 %v354
    %900 = vmatpush1.msra.mxu0 %v353
    %901 = vmatprep.subr.mxu0 %v351
    %902 = vmatpush1.msra.mxu0 %v350
    %903 = vmatprep.subr.mxu0 %v348
    %904 = vmatpush1.msra.mxu0 %v347
    %905 = vmatprep.subr.mxu0 %v345
    %906 = vmatpush1.msra.mxu0 %v344
    %907 = vmatprep.subr.mxu0 %v342
    %908 = vmatpush1.msra.mxu0 %v341
    %909 = vmatprep.subr.mxu0 %v339
    %910 = vmatpush1.msra.mxu0 %v338
    %911 = vmatprep.subr.mxu0 %v336
    %912 = vmatpush1.msra.mxu0 %v335
    %913 = vmatprep.subr.mxu0 %v333
    %914 = vmatpush1.msra.mxu0 %v332
    %915 = vmatprep.subr.mxu0 %v330
    %916 = vmatpush1.msra.mxu0 %v329
    %917 = vmatprep.subr.mxu0 %v327
    %918 = vmatpush1.msra.mxu0 %v326
    %919 = vmatprep.subr.mxu0 %v324
    %920 = vmatpush1.msra.mxu0 %v323
    %921 = vmatprep.subr.mxu0 0.0
    %922 = vmatpush2.msra.mxu0 0.0
    %923 = vmatprep.subr.mxu0 0.0
    %924 = vmatpush2.msra.mxu0 0.0
    %925 = vmatprep.subr.mxu0 0.0
    %926 = vmatpush2.msra.mxu0 0.0
    %927 = vmatprep.subr.mxu0 0.0
    %928 = vmatpush2.msra.mxu0 0.0
    %929 = vmatprep.subr.mxu0 0.0
    %930 = vmatpush2.msra.mxu0 0.0
    %931 = vmatprep.subr.mxu0 0.0
    %932 = vmatpush2.msra.mxu0 0.0
    %933 = vmatprep.subr.mxu0 0.0
    %934 = vmatpush2.msra.mxu0 0.0
    %935 = vmatprep.subr.mxu0 0.0
    %936 = vmatpush2.msra.mxu0 0.0
    %937 = vmatprep.subr.mxu0 0.0
    %938 = vmatpush2.msra.mxu0 0.0
    %939 = vmatprep.subr.mxu0 0.0
    %940 = vmatpush2.msra.mxu0 0.0
    %941 = vmatprep.subr.mxu0 0.0
    %942 = vmatpush2.msra.mxu0 0.0
    %943 = vmatprep.subr.mxu0 0.0
    %944 = vmatpush2.msra.mxu0 0.0
    %945 = vmatprep.subr.mxu0 0.0
    %946 = vmatpush2.msra.mxu0 0.0
    %947 = vmatprep.subr.mxu0 0.0
    %948 = vmatpush2.msra.mxu0 0.0
    %949 = vmatprep.subr.mxu0 0.0
    %950 = vmatpush2.msra.mxu0 0.0
    %951 = vmatprep.subr.mxu0 0.0
    %952 = vmatpush2.msra.mxu0 0.0
    %953 = vmatprep.mubr.f32.mxu0 0.0
    %954 = vmatmul.mubr.f32.gmra.mxu0 %v884
    %v955 = vpop.f32.mrf.mxu0
    %v956 = vadd.f32 %v379, %v955
    %v957 = vpop.f32.mrf.mxu0
    %v958 = vadd.f32 %v383, %v957
    %959 = vdwg.mxu0
    %960 = vmatprep.subr.mxu0 0.0
    %961 = vmatpush1.msra.mxu0 %v370
    %962 = vmatprep.subr.mxu0 0.0
    %963 = vmatpush1.msra.mxu0 %v367
    %964 = vmatprep.subr.mxu0 0.0
    %965 = vmatpush1.msra.mxu0 %v364
    %966 = vmatprep.subr.mxu0 0.0
    %967 = vmatpush1.msra.mxu0 %v361
    %968 = vmatprep.subr.mxu0 0.0
    %969 = vmatpush1.msra.mxu0 %v358
    %970 = vmatprep.subr.mxu0 0.0
    %971 = vmatpush1.msra.mxu0 %v355
    %972 = vmatprep.subr.mxu0 0.0
    %973 = vmatpush1.msra.mxu0 %v352
    %974 = vmatprep.subr.mxu0 0.0
    %975 = vmatpush1.msra.mxu0 %v349
    %976 = vmatprep.subr.mxu0 0.0
    %977 = vmatpush1.msra.mxu0 %v346
    %978 = vmatprep.subr.mxu0 0.0
    %979 = vmatpush1.msra.mxu0 %v343
    %980 = vmatprep.subr.mxu0 0.0
    %981 = vmatpush1.msra.mxu0 %v340
    %982 = vmatprep.subr.mxu0 0.0
    %983 = vmatpush1.msra.mxu0 %v337
    %984 = vmatprep.subr.mxu0 0.0
    %985 = vmatpush1.msra.mxu0 %v334
    %986 = vmatprep.subr.mxu0 0.0
    %987 = vmatpush1.msra.mxu0 %v331
    %988 = vmatprep.subr.mxu0 0.0
    %989 = vmatpush1.msra.mxu0 %v328
    %990 = vmatprep.subr.mxu0 0.0
    %991 = vmatpush1.msra.mxu0 %v325
    %992 = vmatprep.subr.mxu0 0.0
    %993 = vmatpush2.msra.mxu0 0.0
    %994 = vmatprep.subr.mxu0 0.0
    %995 = vmatpush2.msra.mxu0 0.0
    %996 = vmatprep.subr.mxu0 0.0
    %997 = vmatpush2.msra.mxu0 0.0
    %998 = vmatprep.subr.mxu0 0.0
    %999 = vmatpush2.msra.mxu0 0.0
    %1000 = vmatprep.subr.mxu0 0.0
    %1001 = vmatpush2.msra.mxu0 0.0
    %1002 = vmatprep.subr.mxu0 0.0
    %1003 = vmatpush2.msra.mxu0 0.0
    %1004 = vmatprep.subr.mxu0 0.0
    %1005 = vmatpush2.msra.mxu0 0.0
    %1006 = vmatprep.subr.mxu0 0.0
    %1007 = vmatpush2.msra.mxu0 0.0
    %1008 = vmatprep.subr.mxu0 0.0
    %1009 = vmatpush2.msra.mxu0 0.0
    %1010 = vmatprep.subr.mxu0 0.0
    %1011 = vmatpush2.msra.mxu0 0.0
    %1012 = vmatprep.subr.mxu0 0.0
    %1013 = vmatpush2.msra.mxu0 0.0
    %1014 = vmatprep.subr.mxu0 0.0
    %1015 = vmatpush2.msra.mxu0 0.0
    %1016 = vmatprep.subr.mxu0 0.0
    %1017 = vmatpush2.msra.mxu0 0.0
    %1018 = vmatprep.subr.mxu0 0.0
    %1019 = vmatpush2.msra.mxu0 0.0
    %1020 = vmatprep.subr.mxu0 0.0
    %1021 = vmatpush2.msra.mxu0 0.0
    %1022 = vmatprep.subr.mxu0 0.0
    %1023 = vmatpush2.msra.mxu0 0.0
    %1024 = vmatprep.mubr.f32.mxu0 0.0
    %1025 = vmatmul.mubr.f32.gmra.mxu0 %v884
    %v1026 = vpop.f32.mrf.mxu0
    %v1027 = vadd.f32 %v387, %v1026
    %v1028 = vpop.f32.mrf.mxu0
    %1029 = vdwg.mxu0
    %v1030 = vadd.f32 %v886, %v956
    %v1031 = vxor.u32 %v1030, 2147483648
    %v1032 = vmul.f32 %v1031, 1.442695
    %v1033 = vpow.pop %v1032
    %v1034 = vadd.f32 %v1033, 1.0
    %v1035 = vrcp.pop %v1034
    %v1036 = vmul.f32 1.0, %v1035
    %v1037 = vadd.f32 %v887, %v958
    %v1038 = vxor.u32 %v1037, 2147483648
    %v1039 = vmul.f32 %v1038, 1.442695
    %v1040 = vpow.pop %v1039
    %v1041 = vadd.f32 %v1040, 1.0
    %v1042 = vrcp.pop %v1041
    %v1043 = vmul.f32 1.0, %v1042
    %v1044 = vmul.f32 %v1036, %v1027
    %v1045 = vadd.f32 %v888, %v1044
    %v1046 = vtanh.pop %v1045
    %v1047 = vsub.f32 1.0, %v1043
    %v1048 = vmul.f32 %v1047, %v1046
    %v1049 = vmul.f32 %v1043, %v884
    %v1050 = vadd.f32 %v1048, %v1049
    %s1051 = scalar_lea.vmem [#allocation2], 96
    %v1052 = vld [vmem:[%s1051] sm:$0xff]
    %v1053 = vld [vmem:[%s1051 + $0x8] sm:$0xff]
    %v1054 = vld [vmem:[%s1051 + $0x10] sm:$0xff]
    %1055 = vmatprep.subr.mxu0 %v369
    %1056 = vmatpush1.msra.mxu0 %v368
    %1057 = vmatprep.subr.mxu0 %v366
    %1058 = vmatpush1.msra.mxu0 %v365
    %1059 = vmatprep.subr.mxu0 %v363
    %1060 = vmatpush1.msra.mxu0 %v362
    %1061 = vmatprep.subr.mxu0 %v360
    %1062 = vmatpush1.msra.mxu0 %v359
    %1063 = vmatprep.subr.mxu0 %v357
    %1064 = vmatpush1.msra.mxu0 %v356
    %1065 = vmatprep.subr.mxu0 %v354
    %1066 = vmatpush1.msra.mxu0 %v353
    %1067 = vmatprep.subr.mxu0 %v351
    %1068 = vmatpush1.msra.mxu0 %v350
    %1069 = vmatprep.subr.mxu0 %v348
    %1070 = vmatpush1.msra.mxu0 %v347
    %1071 = vmatprep.subr.mxu0 %v345
    %1072 = vmatpush1.msra.mxu0 %v344
    %1073 = vmatprep.subr.mxu0 %v342
    %1074 = vmatpush1.msra.mxu0 %v341
    %1075 = vmatprep.subr.mxu0 %v339
    %1076 = vmatpush1.msra.mxu0 %v338
    %1077 = vmatprep.subr.mxu0 %v336
    %1078 = vmatpush1.msra.mxu0 %v335
    %1079 = vmatprep.subr.mxu0 %v333
    %1080 = vmatpush1.msra.mxu0 %v332
    %1081 = vmatprep.subr.mxu0 %v330
    %1082 = vmatpush1.msra.mxu0 %v329
    %1083 = vmatprep.subr.mxu0 %v327
    %1084 = vmatpush1.msra.mxu0 %v326
    %1085 = vmatprep.subr.mxu0 %v324
    %1086 = vmatpush1.msra.mxu0 %v323
    %1087 = vmatprep.subr.mxu0 0.0
    %1088 = vmatpush2.msra.mxu0 0.0
    %1089 = vmatprep.subr.mxu0 0.0
    %1090 = vmatpush2.msra.mxu0 0.0
    %1091 = vmatprep.subr.mxu0 0.0
    %1092 = vmatpush2.msra.mxu0 0.0
    %1093 = vmatprep.subr.mxu0 0.0
    %1094 = vmatpush2.msra.mxu0 0.0
    %1095 = vmatprep.subr.mxu0 0.0
    %1096 = vmatpush2.msra.mxu0 0.0
    %1097 = vmatprep.subr.mxu0 0.0
    %1098 = vmatpush2.msra.mxu0 0.0
    %1099 = vmatprep.subr.mxu0 0.0
    %1100 = vmatpush2.msra.mxu0 0.0
    %1101 = vmatprep.subr.mxu0 0.0
    %1102 = vmatpush2.msra.mxu0 0.0
    %1103 = vmatprep.subr.mxu0 0.0
    %1104 = vmatpush2.msra.mxu0 0.0
    %1105 = vmatprep.subr.mxu0 0.0
    %1106 = vmatpush2.msra.mxu0 0.0
    %1107 = vmatprep.subr.mxu0 0.0
    %1108 = vmatpush2.msra.mxu0 0.0
    %1109 = vmatprep.subr.mxu0 0.0
    %1110 = vmatpush2.msra.mxu0 0.0
    %1111 = vmatprep.subr.mxu0 0.0
    %1112 = vmatpush2.msra.mxu0 0.0
    %1113 = vmatprep.subr.mxu0 0.0
    %1114 = vmatpush2.msra.mxu0 0.0
    %1115 = vmatprep.subr.mxu0 0.0
    %1116 = vmatpush2.msra.mxu0 0.0
    %1117 = vmatprep.subr.mxu0 0.0
    %1118 = vmatpush2.msra.mxu0 0.0
    %1119 = vmatprep.mubr.f32.mxu0 0.0
    %1120 = vmatmul.mubr.f32.gmra.mxu0 %v1050
    %v1121 = vpop.f32.mrf.mxu0
    %v1122 = vadd.f32 %v379, %v1121
    %v1123 = vpop.f32.mrf.mxu0
    %v1124 = vadd.f32 %v383, %v1123
    %1125 = vdwg.mxu0
    %1126 = vmatprep.subr.mxu0 0.0
    %1127 = vmatpush1.msra.mxu0 %v370
    %1128 = vmatprep.subr.mxu0 0.0
    %1129 = vmatpush1.msra.mxu0 %v367
    %1130 = vmatprep.subr.mxu0 0.0
    %1131 = vmatpush1.msra.mxu0 %v364
    %1132 = vmatprep.subr.mxu0 0.0
    %1133 = vmatpush1.msra.mxu0 %v361
    %1134 = vmatprep.subr.mxu0 0.0
    %1135 = vmatpush1.msra.mxu0 %v358
    %1136 = vmatprep.subr.mxu0 0.0
    %1137 = vmatpush1.msra.mxu0 %v355
    %1138 = vmatprep.subr.mxu0 0.0
    %1139 = vmatpush1.msra.mxu0 %v352
    %1140 = vmatprep.subr.mxu0 0.0
    %1141 = vmatpush1.msra.mxu0 %v349
    %1142 = vmatprep.subr.mxu0 0.0
    %1143 = vmatpush1.msra.mxu0 %v346
    %1144 = vmatprep.subr.mxu0 0.0
    %1145 = vmatpush1.msra.mxu0 %v343
    %1146 = vmatprep.subr.mxu0 0.0
    %1147 = vmatpush1.msra.mxu0 %v340
    %1148 = vmatprep.subr.mxu0 0.0
    %1149 = vmatpush1.msra.mxu0 %v337
    %1150 = vmatprep.subr.mxu0 0.0
    %1151 = vmatpush1.msra.mxu0 %v334
    %1152 = vmatprep.subr.mxu0 0.0
    %1153 = vmatpush1.msra.mxu0 %v331
    %1154 = vmatprep.subr.mxu0 0.0
    %1155 = vmatpush1.msra.mxu0 %v328
    %1156 = vmatprep.subr.mxu0 0.0
    %1157 = vmatpush1.msra.mxu0 %v325
    %1158 = vmatprep.subr.mxu0 0.0
    %1159 = vmatpush2.msra.mxu0 0.0
    %1160 = vmatprep.subr.mxu0 0.0
    %1161 = vmatpush2.msra.mxu0 0.0
    %1162 = vmatprep.subr.mxu0 0.0
    %1163 = vmatpush2.msra.mxu0 0.0
    %1164 = vmatprep.subr.mxu0 0.0
    %1165 = vmatpush2.msra.mxu0 0.0
    %1166 = vmatprep.subr.mxu0 0.0
    %1167 = vmatpush2.msra.mxu0 0.0
    %1168 = vmatprep.subr.mxu0 0.0
    %1169 = vmatpush2.msra.mxu0 0.0
    %1170 = vmatprep.subr.mxu0 0.0
    %1171 = vmatpush2.msra.mxu0 0.0
    %1172 = vmatprep.subr.mxu0 0.0
    %1173 = vmatpush2.msra.mxu0 0.0
    %1174 = vmatprep.subr.mxu0 0.0
    %1175 = vmatpush2.msra.mxu0 0.0
    %1176 = vmatprep.subr.mxu0 0.0
    %1177 = vmatpush2.msra.mxu0 0.0
    %1178 = vmatprep.subr.mxu0 0.0
    %1179 = vmatpush2.msra.mxu0 0.0
    %1180 = vmatprep.subr.mxu0 0.0
    %1181 = vmatpush2.msra.mxu0 0.0
    %1182 = vmatprep.subr.mxu0 0.0
    %1183 = vmatpush2.msra.mxu0 0.0
    %1184 = vmatprep.subr.mxu0 0.0
    %1185 = vmatpush2.msra.mxu0 0.0
    %1186 = vmatprep.subr.mxu0 0.0
    %1187 = vmatpush2.msra.mxu0 0.0
    %1188 = vmatprep.subr.mxu0 0.0
    %1189 = vmatpush2.msra.mxu0 0.0
    %1190 = vmatprep.mubr.f32.mxu0 0.0
    %1191 = vmatmul.mubr.f32.gmra.mxu0 %v1050
    %v1192 = vpop.f32.mrf.mxu0
    %v1193 = vadd.f32 %v387, %v1192
    %v1194 = vpop.f32.mrf.mxu0
    %1195 = vdwg.mxu0
    %v1196 = vadd.f32 %v1052, %v1122
    %v1197 = vxor.u32 %v1196, 2147483648
    %v1198 = vmul.f32 %v1197, 1.442695
    %v1199 = vpow.pop %v1198
    %v1200 = vadd.f32 %v1199, 1.0
    %v1201 = vrcp.pop %v1200
    %v1202 = vmul.f32 1.0, %v1201
    %v1203 = vadd.f32 %v1053, %v1124
    %v1204 = vxor.u32 %v1203, 2147483648
    %v1205 = vmul.f32 %v1204, 1.442695
    %v1206 = vpow.pop %v1205
    %v1207 = vadd.f32 %v1206, 1.0
    %v1208 = vrcp.pop %v1207
    %v1209 = vmul.f32 1.0, %v1208
    %v1210 = vmul.f32 %v1202, %v1193
    %v1211 = vadd.f32 %v1054, %v1210
    %v1212 = vtanh.pop %v1211
    %v1213 = vsub.f32 1.0, %v1209
    %v1214 = vmul.f32 %v1213, %v1212
    %v1215 = vmul.f32 %v1209, %v1050
    %v1216 = vadd.f32 %v1214, %v1215
    %s1217 = scalar_lea.vmem [#allocation2], 120
    %v1218 = vld [vmem:[%s1217] sm:$0xff]
    %v1219 = vld [vmem:[%s1217 + $0x8] sm:$0xff]
    %v1220 = vld [vmem:[%s1217 + $0x10] sm:$0xff]
    %1221 = vmatprep.subr.mxu0 %v369
    %1222 = vmatpush1.msra.mxu0 %v368
    %1223 = vmatprep.subr.mxu0 %v366
    %1224 = vmatpush1.msra.mxu0 %v365
    %1225 = vmatprep.subr.mxu0 %v363
    %1226 = vmatpush1.msra.mxu0 %v362
    %1227 = vmatprep.subr.mxu0 %v360
    %1228 = vmatpush1.msra.mxu0 %v359
    %1229 = vmatprep.subr.mxu0 %v357
    %1230 = vmatpush1.msra.mxu0 %v356
    %1231 = vmatprep.subr.mxu0 %v354
    %1232 = vmatpush1.msra.mxu0 %v353
    %1233 = vmatprep.subr.mxu0 %v351
    %1234 = vmatpush1.msra.mxu0 %v350
    %1235 = vmatprep.subr.mxu0 %v348
    %1236 = vmatpush1.msra.mxu0 %v347
    %1237 = vmatprep.subr.mxu0 %v345
    %1238 = vmatpush1.msra.mxu0 %v344
    %1239 = vmatprep.subr.mxu0 %v342
    %1240 = vmatpush1.msra.mxu0 %v341
    %1241 = vmatprep.subr.mxu0 %v339
    %1242 = vmatpush1.msra.mxu0 %v338
    %1243 = vmatprep.subr.mxu0 %v336
    %1244 = vmatpush1.msra.mxu0 %v335
    %1245 = vmatprep.subr.mxu0 %v333
    %1246 = vmatpush1.msra.mxu0 %v332
    %1247 = vmatprep.subr.mxu0 %v330
    %1248 = vmatpush1.msra.mxu0 %v329
    %1249 = vmatprep.subr.mxu0 %v327
    %1250 = vmatpush1.msra.mxu0 %v326
    %1251 = vmatprep.subr.mxu0 %v324
    %1252 = vmatpush1.msra.mxu0 %v323
    %1253 = vmatprep.subr.mxu0 0.0
    %1254 = vmatpush2.msra.mxu0 0.0
    %1255 = vmatprep.subr.mxu0 0.0
    %1256 = vmatpush2.msra.mxu0 0.0
    %1257 = vmatprep.subr.mxu0 0.0
    %1258 = vmatpush2.msra.mxu0 0.0
    %1259 = vmatprep.subr.mxu0 0.0
    %1260 = vmatpush2.msra.mxu0 0.0
    %1261 = vmatprep.subr.mxu0 0.0
    %1262 = vmatpush2.msra.mxu0 0.0
    %1263 = vmatprep.subr.mxu0 0.0
    %1264 = vmatpush2.msra.mxu0 0.0
    %1265 = vmatprep.subr.mxu0 0.0
    %1266 = vmatpush2.msra.mxu0 0.0
    %1267 = vmatprep.subr.mxu0 0.0
    %1268 = vmatpush2.msra.mxu0 0.0
    %1269 = vmatprep.subr.mxu0 0.0
    %1270 = vmatpush2.msra.mxu0 0.0
    %1271 = vmatprep.subr.mxu0 0.0
    %1272 = vmatpush2.msra.mxu0 0.0
    %1273 = vmatprep.subr.mxu0 0.0
    %1274 = vmatpush2.msra.mxu0 0.0
    %1275 = vmatprep.subr.mxu0 0.0
    %1276 = vmatpush2.msra.mxu0 0.0
    %1277 = vmatprep.subr.mxu0 0.0
    %1278 = vmatpush2.msra.mxu0 0.0
    %1279 = vmatprep.subr.mxu0 0.0
    %1280 = vmatpush2.msra.mxu0 0.0
    %1281 = vmatprep.subr.mxu0 0.0
    %1282 = vmatpush2.msra.mxu0 0.0
    %1283 = vmatprep.subr.mxu0 0.0
    %1284 = vmatpush2.msra.mxu0 0.0
    %1285 = vmatprep.mubr.f32.mxu0 0.0
    %1286 = vmatmul.mubr.f32.gmra.mxu0 %v1216
    %v1287 = vpop.f32.mrf.mxu0
    %v1288 = vadd.f32 %v379, %v1287
    %v1289 = vpop.f32.mrf.mxu0
    %v1290 = vadd.f32 %v383, %v1289
    %1291 = vdwg.mxu0
    %1292 = vmatprep.subr.mxu0 0.0
    %1293 = vmatpush1.msra.mxu0 %v370
    %1294 = vmatprep.subr.mxu0 0.0
    %1295 = vmatpush1.msra.mxu0 %v367
    %1296 = vmatprep.subr.mxu0 0.0
    %1297 = vmatpush1.msra.mxu0 %v364
    %1298 = vmatprep.subr.mxu0 0.0
    %1299 = vmatpush1.msra.mxu0 %v361
    %1300 = vmatprep.subr.mxu0 0.0
    %1301 = vmatpush1.msra.mxu0 %v358
    %1302 = vmatprep.subr.mxu0 0.0
    %1303 = vmatpush1.msra.mxu0 %v355
    %1304 = vmatprep.subr.mxu0 0.0
    %1305 = vmatpush1.msra.mxu0 %v352
    %1306 = vmatprep.subr.mxu0 0.0
    %1307 = vmatpush1.msra.mxu0 %v349
    %1308 = vmatprep.subr.mxu0 0.0
    %1309 = vmatpush1.msra.mxu0 %v346
    %1310 = vmatprep.subr.mxu0 0.0
    %1311 = vmatpush1.msra.mxu0 %v343
    %1312 = vmatprep.subr.mxu0 0.0
    %1313 = vmatpush1.msra.mxu0 %v340
    %1314 = vmatprep.subr.mxu0 0.0
    %1315 = vmatpush1.msra.mxu0 %v337
    %1316 = vmatprep.subr.mxu0 0.0
    %1317 = vmatpush1.msra.mxu0 %v334
    %1318 = vmatprep.subr.mxu0 0.0
    %1319 = vmatpush1.msra.mxu0 %v331
    %1320 = vmatprep.subr.mxu0 0.0
    %1321 = vmatpush1.msra.mxu0 %v328
    %1322 = vmatprep.subr.mxu0 0.0
    %1323 = vmatpush1.msra.mxu0 %v325
    %1324 = vmatprep.subr.mxu0 0.0
    %1325 = vmatpush2.msra.mxu0 0.0
    %1326 = vmatprep.subr.mxu0 0.0
    %1327 = vmatpush2.msra.mxu0 0.0
    %1328 = vmatprep.subr.mxu0 0.0
    %1329 = vmatpush2.msra.mxu0 0.0
    %1330 = vmatprep.subr.mxu0 0.0
    %1331 = vmatpush2.msra.mxu0 0.0
    %1332 = vmatprep.subr.mxu0 0.0
    %1333 = vmatpush2.msra.mxu0 0.0
    %1334 = vmatprep.subr.mxu0 0.0
    %1335 = vmatpush2.msra.mxu0 0.0
    %1336 = vmatprep.subr.mxu0 0.0
    %1337 = vmatpush2.msra.mxu0 0.0
    %1338 = vmatprep.subr.mxu0 0.0
    %1339 = vmatpush2.msra.mxu0 0.0
    %1340 = vmatprep.subr.mxu0 0.0
    %1341 = vmatpush2.msra.mxu0 0.0
    %1342 = vmatprep.subr.mxu0 0.0
    %1343 = vmatpush2.msra.mxu0 0.0
    %1344 = vmatprep.subr.mxu0 0.0
    %1345 = vmatpush2.msra.mxu0 0.0
    %1346 = vmatprep.subr.mxu0 0.0
    %1347 = vmatpush2.msra.mxu0 0.0
    %1348 = vmatprep.subr.mxu0 0.0
    %1349 = vmatpush2.msra.mxu0 0.0
    %1350 = vmatprep.subr.mxu0 0.0
    %1351 = vmatpush2.msra.mxu0 0.0
    %1352 = vmatprep.subr.mxu0 0.0
    %1353 = vmatpush2.msra.mxu0 0.0
    %1354 = vmatprep.subr.mxu0 0.0
    %1355 = vmatpush2.msra.mxu0 0.0
    %1356 = vmatprep.mubr.f32.mxu0 0.0
    %1357 = vmatmul.mubr.f32.gmra.mxu0 %v1216
    %v1358 = vpop.f32.mrf.mxu0
    %v1359 = vadd.f32 %v387, %v1358
    %v1360 = vpop.f32.mrf.mxu0
    %1361 = vdwg.mxu0
    %v1362 = vadd.f32 %v1218, %v1288
    %v1363 = vxor.u32 %v1362, 2147483648
    %v1364 = vmul.f32 %v1363, 1.442695
    %v1365 = vpow.pop %v1364
    %v1366 = vadd.f32 %v1365, 1.0
    %v1367 = vrcp.pop %v1366
    %v1368 = vmul.f32 1.0, %v1367
    %v1369 = vadd.f32 %v1219, %v1290
    %v1370 = vxor.u32 %v1369, 2147483648
    %v1371 = vmul.f32 %v1370, 1.442695
    %v1372 = vpow.pop %v1371
    %v1373 = vadd.f32 %v1372, 1.0
    %v1374 = vrcp.pop %v1373
    %v1375 = vmul.f32 1.0, %v1374
    %v1376 = vmul.f32 %v1368, %v1359
    %v1377 = vadd.f32 %v1220, %v1376
    %v1378 = vtanh.pop %v1377
    %v1379 = vsub.f32 1.0, %v1375
    %v1380 = vmul.f32 %v1379, %v1378
    %v1381 = vmul.f32 %v1375, %v1216
    %v1382 = vadd.f32 %v1380, %v1381
    %s1383 = scalar_lea.vmem [#allocation2], 144
    %v1384 = vld [vmem:[%s1383] sm:$0xff]
    %v1385 = vld [vmem:[%s1383 + $0x8] sm:$0xff]
    %v1386 = vld [vmem:[%s1383 + $0x10] sm:$0xff]
    %1387 = vmatprep.subr.mxu0 %v369
    %1388 = vmatpush1.msra.mxu0 %v368
    %1389 = vmatprep.subr.mxu0 %v366
    %1390 = vmatpush1.msra.mxu0 %v365
    %1391 = vmatprep.subr.mxu0 %v363
    %1392 = vmatpush1.msra.mxu0 %v362
    %1393 = vmatprep.subr.mxu0 %v360
    %1394 = vmatpush1.msra.mxu0 %v359
    %1395 = vmatprep.subr.mxu0 %v357
    %1396 = vmatpush1.msra.mxu0 %v356
    %1397 = vmatprep.subr.mxu0 %v354
    %1398 = vmatpush1.msra.mxu0 %v353
    %1399 = vmatprep.subr.mxu0 %v351
    %1400 = vmatpush1.msra.mxu0 %v350
    %1401 = vmatprep.subr.mxu0 %v348
    %1402 = vmatpush1.msra.mxu0 %v347
    %1403 = vmatprep.subr.mxu0 %v345
    %1404 = vmatpush1.msra.mxu0 %v344
    %1405 = vmatprep.subr.mxu0 %v342
    %1406 = vmatpush1.msra.mxu0 %v341
    %1407 = vmatprep.subr.mxu0 %v339
    %1408 = vmatpush1.msra.mxu0 %v338
    %1409 = vmatprep.subr.mxu0 %v336
    %1410 = vmatpush1.msra.mxu0 %v335
    %1411 = vmatprep.subr.mxu0 %v333
    %1412 = vmatpush1.msra.mxu0 %v332
    %1413 = vmatprep.subr.mxu0 %v330
    %1414 = vmatpush1.msra.mxu0 %v329
    %1415 = vmatprep.subr.mxu0 %v327
    %1416 = vmatpush1.msra.mxu0 %v326
    %1417 = vmatprep.subr.mxu0 %v324
    %1418 = vmatpush1.msra.mxu0 %v323
    %1419 = vmatprep.subr.mxu0 0.0
    %1420 = vmatpush2.msra.mxu0 0.0
    %1421 = vmatprep.subr.mxu0 0.0
    %1422 = vmatpush2.msra.mxu0 0.0
    %1423 = vmatprep.subr.mxu0 0.0
    %1424 = vmatpush2.msra.mxu0 0.0
    %1425 = vmatprep.subr.mxu0 0.0
    %1426 = vmatpush2.msra.mxu0 0.0
    %1427 = vmatprep.subr.mxu0 0.0
    %1428 = vmatpush2.msra.mxu0 0.0
    %1429 = vmatprep.subr.mxu0 0.0
    %1430 = vmatpush2.msra.mxu0 0.0
    %1431 = vmatprep.subr.mxu0 0.0
    %1432 = vmatpush2.msra.mxu0 0.0
    %1433 = vmatprep.subr.mxu0 0.0
    %1434 = vmatpush2.msra.mxu0 0.0
    %1435 = vmatprep.subr.mxu0 0.0
    %1436 = vmatpush2.msra.mxu0 0.0
    %1437 = vmatprep.subr.mxu0 0.0
    %1438 = vmatpush2.msra.mxu0 0.0
    %1439 = vmatprep.subr.mxu0 0.0
    %1440 = vmatpush2.msra.mxu0 0.0
    %1441 = vmatprep.subr.mxu0 0.0
    %1442 = vmatpush2.msra.mxu0 0.0
    %1443 = vmatprep.subr.mxu0 0.0
    %1444 = vmatpush2.msra.mxu0 0.0
    %1445 = vmatprep.subr.mxu0 0.0
    %1446 = vmatpush2.msra.mxu0 0.0
    %1447 = vmatprep.subr.mxu0 0.0
    %1448 = vmatpush2.msra.mxu0 0.0
    %1449 = vmatprep.subr.mxu0 0.0
    %1450 = vmatpush2.msra.mxu0 0.0
    %1451 = vmatprep.mubr.f32.mxu0 0.0
    %1452 = vmatmul.mubr.f32.gmra.mxu0 %v1382
    %v1453 = vpop.f32.mrf.mxu0
    %v1454 = vadd.f32 %v379, %v1453
    %v1455 = vpop.f32.mrf.mxu0
    %v1456 = vadd.f32 %v383, %v1455
    %1457 = vdwg.mxu0
    %1458 = vmatprep.subr.mxu0 0.0
    %1459 = vmatpush1.msra.mxu0 %v370
    %1460 = vmatprep.subr.mxu0 0.0
    %1461 = vmatpush1.msra.mxu0 %v367
    %1462 = vmatprep.subr.mxu0 0.0
    %1463 = vmatpush1.msra.mxu0 %v364
    %1464 = vmatprep.subr.mxu0 0.0
    %1465 = vmatpush1.msra.mxu0 %v361
    %1466 = vmatprep.subr.mxu0 0.0
    %1467 = vmatpush1.msra.mxu0 %v358
    %1468 = vmatprep.subr.mxu0 0.0
    %1469 = vmatpush1.msra.mxu0 %v355
    %1470 = vmatprep.subr.mxu0 0.0
    %1471 = vmatpush1.msra.mxu0 %v352
    %1472 = vmatprep.subr.mxu0 0.0
    %1473 = vmatpush1.msra.mxu0 %v349
    %1474 = vmatprep.subr.mxu0 0.0
    %1475 = vmatpush1.msra.mxu0 %v346
    %1476 = vmatprep.subr.mxu0 0.0
    %1477 = vmatpush1.msra.mxu0 %v343
    %1478 = vmatprep.subr.mxu0 0.0
    %1479 = vmatpush1.msra.mxu0 %v340
    %1480 = vmatprep.subr.mxu0 0.0
    %1481 = vmatpush1.msra.mxu0 %v337
    %1482 = vmatprep.subr.mxu0 0.0
    %1483 = vmatpush1.msra.mxu0 %v334
    %1484 = vmatprep.subr.mxu0 0.0
    %1485 = vmatpush1.msra.mxu0 %v331
    %1486 = vmatprep.subr.mxu0 0.0
    %1487 = vmatpush1.msra.mxu0 %v328
    %1488 = vmatprep.subr.mxu0 0.0
    %1489 = vmatpush1.msra.mxu0 %v325
    %1490 = vmatprep.subr.mxu0 0.0
    %1491 = vmatpush2.msra.mxu0 0.0
    %1492 = vmatprep.subr.mxu0 0.0
    %1493 = vmatpush2.msra.mxu0 0.0
    %1494 = vmatprep.subr.mxu0 0.0
    %1495 = vmatpush2.msra.mxu0 0.0
    %1496 = vmatprep.subr.mxu0 0.0
    %1497 = vmatpush2.msra.mxu0 0.0
    %1498 = vmatprep.subr.mxu0 0.0
    %1499 = vmatpush2.msra.mxu0 0.0
    %1500 = vmatprep.subr.mxu0 0.0
    %1501 = vmatpush2.msra.mxu0 0.0
    %1502 = vmatprep.subr.mxu0 0.0
    %1503 = vmatpush2.msra.mxu0 0.0
    %1504 = vmatprep.subr.mxu0 0.0
    %1505 = vmatpush2.msra.mxu0 0.0
    %1506 = vmatprep.subr.mxu0 0.0
    %1507 = vmatpush2.msra.mxu0 0.0
    %1508 = vmatprep.subr.mxu0 0.0
    %1509 = vmatpush2.msra.mxu0 0.0
    %1510 = vmatprep.subr.mxu0 0.0
    %1511 = vmatpush2.msra.mxu0 0.0
    %1512 = vmatprep.subr.mxu0 0.0
    %1513 = vmatpush2.msra.mxu0 0.0
    %1514 = vmatprep.subr.mxu0 0.0
    %1515 = vmatpush2.msra.mxu0 0.0
    %1516 = vmatprep.subr.mxu0 0.0
    %1517 = vmatpush2.msra.mxu0 0.0
    %1518 = vmatprep.subr.mxu0 0.0
    %1519 = vmatpush2.msra.mxu0 0.0
    %1520 = vmatprep.subr.mxu0 0.0
    %1521 = vmatpush2.msra.mxu0 0.0
    %1522 = vmatprep.mubr.f32.mxu0 0.0
    %1523 = vmatmul.mubr.f32.gmra.mxu0 %v1382
    %v1524 = vpop.f32.mrf.mxu0
    %v1525 = vadd.f32 %v387, %v1524
    %v1526 = vpop.f32.mrf.mxu0
    %1527 = vdwg.mxu0
    %v1528 = vadd.f32 %v1384, %v1454
    %v1529 = vxor.u32 %v1528, 2147483648
    %v1530 = vmul.f32 %v1529, 1.442695
    %v1531 = vpow.pop %v1530
    %v1532 = vadd.f32 %v1531, 1.0
    %v1533 = vrcp.pop %v1532
    %v1534 = vmul.f32 1.0, %v1533
    %v1535 = vadd.f32 %v1385, %v1456
    %v1536 = vxor.u32 %v1535, 2147483648
    %v1537 = vmul.f32 %v1536, 1.442695
    %v1538 = vpow.pop %v1537
    %v1539 = vadd.f32 %v1538, 1.0
    %v1540 = vrcp.pop %v1539
    %v1541 = vmul.f32 1.0, %v1540
    %v1542 = vmul.f32 %v1534, %v1525
    %v1543 = vadd.f32 %v1386, %v1542
    %v1544 = vtanh.pop %v1543
    %v1545 = vsub.f32 1.0, %v1541
    %v1546 = vmul.f32 %v1545, %v1544
    %v1547 = vmul.f32 %v1541, %v1382
    %v1548 = vadd.f32 %v1546, %v1547
    %s1549 = scalar_lea.vmem [#allocation2], 168
    %v1550 = vld [vmem:[%s1549] sm:$0xff]
    %v1551 = vld [vmem:[%s1549 + $0x8] sm:$0xff]
    %v1552 = vld [vmem:[%s1549 + $0x10] sm:$0xff]
    %1553 = vmatprep.subr.mxu0 %v369
    %1554 = vmatpush1.msra.mxu0 %v368
    %1555 = vmatprep.subr.mxu0 %v366
    %1556 = vmatpush1.msra.mxu0 %v365
    %1557 = vmatprep.subr.mxu0 %v363
    %1558 = vmatpush1.msra.mxu0 %v362
    %1559 = vmatprep.subr.mxu0 %v360
    %1560 = vmatpush1.msra.mxu0 %v359
    %1561 = vmatprep.subr.mxu0 %v357
    %1562 = vmatpush1.msra.mxu0 %v356
    %1563 = vmatprep.subr.mxu0 %v354
    %1564 = vmatpush1.msra.mxu0 %v353
    %1565 = vmatprep.subr.mxu0 %v351
    %1566 = vmatpush1.msra.mxu0 %v350
    %1567 = vmatprep.subr.mxu0 %v348
    %1568 = vmatpush1.msra.mxu0 %v347
    %1569 = vmatprep.subr.mxu0 %v345
    %1570 = vmatpush1.msra.mxu0 %v344
    %1571 = vmatprep.subr.mxu0 %v342
    %1572 = vmatpush1.msra.mxu0 %v341
    %1573 = vmatprep.subr.mxu0 %v339
    %1574 = vmatpush1.msra.mxu0 %v338
    %1575 = vmatprep.subr.mxu0 %v336
    %1576 = vmatpush1.msra.mxu0 %v335
    %1577 = vmatprep.subr.mxu0 %v333
    %1578 = vmatpush1.msra.mxu0 %v332
    %1579 = vmatprep.subr.mxu0 %v330
    %1580 = vmatpush1.msra.mxu0 %v329
    %1581 = vmatprep.subr.mxu0 %v327
    %1582 = vmatpush1.msra.mxu0 %v326
    %1583 = vmatprep.subr.mxu0 %v324
    %1584 = vmatpush1.msra.mxu0 %v323
    %1585 = vmatprep.subr.mxu0 0.0
    %1586 = vmatpush2.msra.mxu0 0.0
    %1587 = vmatprep.subr.mxu0 0.0
    %1588 = vmatpush2.msra.mxu0 0.0
    %1589 = vmatprep.subr.mxu0 0.0
    %1590 = vmatpush2.msra.mxu0 0.0
    %1591 = vmatprep.subr.mxu0 0.0
    %1592 = vmatpush2.msra.mxu0 0.0
    %1593 = vmatprep.subr.mxu0 0.0
    %1594 = vmatpush2.msra.mxu0 0.0
    %1595 = vmatprep.subr.mxu0 0.0
    %1596 = vmatpush2.msra.mxu0 0.0
    %1597 = vmatprep.subr.mxu0 0.0
    %1598 = vmatpush2.msra.mxu0 0.0
    %1599 = vmatprep.subr.mxu0 0.0
    %1600 = vmatpush2.msra.mxu0 0.0
    %1601 = vmatprep.subr.mxu0 0.0
    %1602 = vmatpush2.msra.mxu0 0.0
    %1603 = vmatprep.subr.mxu0 0.0
    %1604 = vmatpush2.msra.mxu0 0.0
    %1605 = vmatprep.subr.mxu0 0.0
    %1606 = vmatpush2.msra.mxu0 0.0
    %1607 = vmatprep.subr.mxu0 0.0
    %1608 = vmatpush2.msra.mxu0 0.0
    %1609 = vmatprep.subr.mxu0 0.0
    %1610 = vmatpush2.msra.mxu0 0.0
    %1611 = vmatprep.subr.mxu0 0.0
    %1612 = vmatpush2.msra.mxu0 0.0
    %1613 = vmatprep.subr.mxu0 0.0
    %1614 = vmatpush2.msra.mxu0 0.0
    %1615 = vmatprep.subr.mxu0 0.0
    %1616 = vmatpush2.msra.mxu0 0.0
    %1617 = vmatprep.mubr.f32.mxu0 0.0
    %1618 = vmatmul.mubr.f32.gmra.mxu0 %v1548
    %v1619 = vpop.f32.mrf.mxu0
    %v1620 = vadd.f32 %v379, %v1619
    %v1621 = vpop.f32.mrf.mxu0
    %v1622 = vadd.f32 %v383, %v1621
    %1623 = vdwg.mxu0
    %1624 = vmatprep.subr.mxu0 0.0
    %1625 = vmatpush1.msra.mxu0 %v370
    %1626 = vmatprep.subr.mxu0 0.0
    %1627 = vmatpush1.msra.mxu0 %v367
    %1628 = vmatprep.subr.mxu0 0.0
    %1629 = vmatpush1.msra.mxu0 %v364
    %1630 = vmatprep.subr.mxu0 0.0
    %1631 = vmatpush1.msra.mxu0 %v361
    %1632 = vmatprep.subr.mxu0 0.0
    %1633 = vmatpush1.msra.mxu0 %v358
    %1634 = vmatprep.subr.mxu0 0.0
    %1635 = vmatpush1.msra.mxu0 %v355
    %1636 = vmatprep.subr.mxu0 0.0
    %1637 = vmatpush1.msra.mxu0 %v352
    %1638 = vmatprep.subr.mxu0 0.0
    %1639 = vmatpush1.msra.mxu0 %v349
    %1640 = vmatprep.subr.mxu0 0.0
    %1641 = vmatpush1.msra.mxu0 %v346
    %1642 = vmatprep.subr.mxu0 0.0
    %1643 = vmatpush1.msra.mxu0 %v343
    %1644 = vmatprep.subr.mxu0 0.0
    %1645 = vmatpush1.msra.mxu0 %v340
    %1646 = vmatprep.subr.mxu0 0.0
    %1647 = vmatpush1.msra.mxu0 %v337
    %1648 = vmatprep.subr.mxu0 0.0
    %1649 = vmatpush1.msra.mxu0 %v334
    %1650 = vmatprep.subr.mxu0 0.0
    %1651 = vmatpush1.msra.mxu0 %v331
    %1652 = vmatprep.subr.mxu0 0.0
    %1653 = vmatpush1.msra.mxu0 %v328
    %1654 = vmatprep.subr.mxu0 0.0
    %1655 = vmatpush1.msra.mxu0 %v325
    %1656 = vmatprep.subr.mxu0 0.0
    %1657 = vmatpush2.msra.mxu0 0.0
    %1658 = vmatprep.subr.mxu0 0.0
    %1659 = vmatpush2.msra.mxu0 0.0
    %1660 = vmatprep.subr.mxu0 0.0
    %1661 = vmatpush2.msra.mxu0 0.0
    %1662 = vmatprep.subr.mxu0 0.0
    %1663 = vmatpush2.msra.mxu0 0.0
    %1664 = vmatprep.subr.mxu0 0.0
    %1665 = vmatpush2.msra.mxu0 0.0
    %1666 = vmatprep.subr.mxu0 0.0
    %1667 = vmatpush2.msra.mxu0 0.0
    %1668 = vmatprep.subr.mxu0 0.0
    %1669 = vmatpush2.msra.mxu0 0.0
    %1670 = vmatprep.subr.mxu0 0.0
    %1671 = vmatpush2.msra.mxu0 0.0
    %1672 = vmatprep.subr.mxu0 0.0
    %1673 = vmatpush2.msra.mxu0 0.0
    %1674 = vmatprep.subr.mxu0 0.0
    %1675 = vmatpush2.msra.mxu0 0.0
    %1676 = vmatprep.subr.mxu0 0.0
    %1677 = vmatpush2.msra.mxu0 0.0
    %1678 = vmatprep.subr.mxu0 0.0
    %1679 = vmatpush2.msra.mxu0 0.0
    %1680 = vmatprep.subr.mxu0 0.0
    %1681 = vmatpush2.msra.mxu0 0.0
    %1682 = vmatprep.subr.mxu0 0.0
    %1683 = vmatpush2.msra.mxu0 0.0
    %1684 = vmatprep.subr.mxu0 0.0
    %1685 = vmatpush2.msra.mxu0 0.0
    %1686 = vmatprep.subr.mxu0 0.0
    %1687 = vmatpush2.msra.mxu0 0.0
    %1688 = vmatprep.mubr.f32.mxu0 0.0
    %1689 = vmatmul.mubr.f32.gmra.mxu0 %v1548
    %v1690 = vpop.f32.mrf.mxu0
    %v1691 = vadd.f32 %v387, %v1690
    %v1692 = vpop.f32.mrf.mxu0
    %1693 = vdwg.mxu0
    %v1694 = vadd.f32 %v1550, %v1620
    %v1695 = vxor.u32 %v1694, 2147483648
    %v1696 = vmul.f32 %v1695, 1.442695
    %v1697 = vpow.pop %v1696
    %v1698 = vadd.f32 %v1697, 1.0
    %v1699 = vrcp.pop %v1698
    %v1700 = vmul.f32 1.0, %v1699
    %v1701 = vadd.f32 %v1551, %v1622
    %v1702 = vxor.u32 %v1701, 2147483648
    %v1703 = vmul.f32 %v1702, 1.442695
    %v1704 = vpow.pop %v1703
    %v1705 = vadd.f32 %v1704, 1.0
    %v1706 = vrcp.pop %v1705
    %v1707 = vmul.f32 1.0, %v1706
    %v1708 = vmul.f32 %v1700, %v1691
    %v1709 = vadd.f32 %v1552, %v1708
    %v1710 = vtanh.pop %v1709
    %v1711 = vsub.f32 1.0, %v1707
    %v1712 = vmul.f32 %v1711, %v1710
    %v1713 = vmul.f32 %v1707, %v1548
    %v1714 = vadd.f32 %v1712, %v1713
    %v1715 = vld [vmem:[#allocation9] sm:$0xff]
    %v1716 = vld [vmem:[#allocation9 + $0x8] sm:$0xff]
    %v1717 = vld [vmem:[#allocation9 + $0x10] sm:$0xff]
    %v1718 = vld [vmem:[#allocation9 + $0x18] sm:$0xff]
    %v1719 = vld [vmem:[#allocation9 + $0x20] sm:$0xff]
    %v1720 = vld [vmem:[#allocation9 + $0x28] sm:$0xff]
    %v1721 = vld [vmem:[#allocation9 + $0x30] sm:$0xff]
    %v1722 = vld [vmem:[#allocation9 + $0x38] sm:$0xff]
    %v1723 = vld [vmem:[#allocation9 + $0x40] sm:$0xff]
    %v1724 = vld [vmem:[#allocation9 + $0x48] sm:$0xff]
    %v1725 = vld [vmem:[#allocation9 + $0x50] sm:$0xff]
    %v1726 = vld [vmem:[#allocation9 + $0x58] sm:$0xff]
    %v1727 = vld [vmem:[#allocation9 + $0x60] sm:$0xff]
    %v1728 = vld [vmem:[#allocation9 + $0x68] sm:$0xff]
    %v1729 = vld [vmem:[#allocation9 + $0x70] sm:$0xff]
    %v1730 = vld [vmem:[#allocation9 + $0x78] sm:$0xff]
    %v1731 = vld [vmem:[%s6] sm:$0x1]
    %v1733 = vlaneseq
    %v1734 = vshrl.u32 %v1733, 7
    %v1735 = vsub.s32 0, %v1734
    %v1736 = vrot.slane %v1731, %v1735
    %1738 = vmatprep.subr.mxu0 0.0
    %1739 = vmatpush1.msra.mxu0 %v1730
    %1740 = vmatprep.subr.mxu0 0.0
    %1741 = vmatpush1.msra.mxu0 %v1729
    %1742 = vmatprep.subr.mxu0 0.0
    %1743 = vmatpush1.msra.mxu0 %v1728
    %1744 = vmatprep.subr.mxu0 0.0
    %1745 = vmatpush1.msra.mxu0 %v1727
    %1746 = vmatprep.subr.mxu0 0.0
    %1747 = vmatpush1.msra.mxu0 %v1726
    %1748 = vmatprep.subr.mxu0 0.0
    %1749 = vmatpush1.msra.mxu0 %v1725
    %1750 = vmatprep.subr.mxu0 0.0
    %1751 = vmatpush1.msra.mxu0 %v1724
    %1752 = vmatprep.subr.mxu0 0.0
    %1753 = vmatpush1.msra.mxu0 %v1723
    %1754 = vmatprep.subr.mxu0 0.0
    %1755 = vmatpush1.msra.mxu0 %v1722
    %1756 = vmatprep.subr.mxu0 0.0
    %1757 = vmatpush1.msra.mxu0 %v1721
    %1758 = vmatprep.subr.mxu0 0.0
    %1759 = vmatpush1.msra.mxu0 %v1720
    %1760 = vmatprep.subr.mxu0 0.0
    %1761 = vmatpush1.msra.mxu0 %v1719
    %1762 = vmatprep.subr.mxu0 0.0
    %1763 = vmatpush1.msra.mxu0 %v1718
    %1764 = vmatprep.subr.mxu0 0.0
    %1765 = vmatpush1.msra.mxu0 %v1717
    %1766 = vmatprep.subr.mxu0 0.0
    %1767 = vmatpush1.msra.mxu0 %v1716
    %1768 = vmatprep.subr.mxu0 0.0
    %1769 = vmatpush1.msra.mxu0 %v1715
    %1770 = vmatprep.subr.mxu0 0.0
    %1771 = vmatpush2.msra.mxu0 0.0
    %1772 = vmatprep.subr.mxu0 0.0
    %1773 = vmatpush2.msra.mxu0 0.0
    %1774 = vmatprep.subr.mxu0 0.0
    %1775 = vmatpush2.msra.mxu0 0.0
    %1776 = vmatprep.subr.mxu0 0.0
    %1777 = vmatpush2.msra.mxu0 0.0
    %1778 = vmatprep.subr.mxu0 0.0
    %1779 = vmatpush2.msra.mxu0 0.0
    %1780 = vmatprep.subr.mxu0 0.0
    %1781 = vmatpush2.msra.mxu0 0.0
    %1782 = vmatprep.subr.mxu0 0.0
    %1783 = vmatpush2.msra.mxu0 0.0
    %1784 = vmatprep.subr.mxu0 0.0
    %1785 = vmatpush2.msra.mxu0 0.0
    %1786 = vmatprep.subr.mxu0 0.0
    %1787 = vmatpush2.msra.mxu0 0.0
    %1788 = vmatprep.subr.mxu0 0.0
    %1789 = vmatpush2.msra.mxu0 0.0
    %1790 = vmatprep.subr.mxu0 0.0
    %1791 = vmatpush2.msra.mxu0 0.0
    %1792 = vmatprep.subr.mxu0 0.0
    %1793 = vmatpush2.msra.mxu0 0.0
    %1794 = vmatprep.subr.mxu0 0.0
    %1795 = vmatpush2.msra.mxu0 0.0
    %1796 = vmatprep.subr.mxu0 0.0
    %1797 = vmatpush2.msra.mxu0 0.0
    %1798 = vmatprep.subr.mxu0 0.0
    %1799 = vmatpush2.msra.mxu0 0.0
    %1800 = vmatprep.subr.mxu0 0.0
    %1801 = vmatpush2.msra.mxu0 0.0
    %1802 = vmatprep.mubr.f32.mxu0 0.0
    %1803 = vmatmul.mubr.f32.gmra.mxu0 %v1714
    %v1804 = vpop.f32.mrf.mxu0
    %v1805 = vadd.f32 %v1736, %v1804
    %v1806 = vpop.f32.mrf.mxu0
    %1807 = vdwg.mxu0
    %1808 = vst [vmem:[#allocation11] sm:$0xff] %v1805
    // Predicated region
    $region46: #{tpu_custom_call.1} parent=1 // pred_check
      _
    $region47: #{tpu_custom_call.1} parent=1 // pred_check_branch
      %1810 = sbr.rel (0) target = $region49
    $region48: #{tpu_custom_call.1} parent=1 // pred_region
      %s1812 = ssub.s32 128, 128
      %1813 = vsyncadd [#allocation5], %s1812
      %s1815 = sshll.u32 [#allocation11], 4
      %s1816 = int_to_ptr.vmem [resolvable:$true] %s1815
      %1818 = dma.vmem_to_hbm [thread:$0]  %s1816, 128, %s7, [#allocation5]
    $region49: #{tpu_custom_call.1} parent=1 // pred_fallthru
      _
    // Predicated region
    $region50: #{tpu_custom_call.1} parent=1 // pred_check
      _
    $region51: #{tpu_custom_call.1} parent=1 // pred_check_branch
      %1820 = sbr.rel (0) target = $region53
    $region52: #{tpu_custom_call.1} parent=1 // pred_region
      %1821 = dma.done [#allocation5], 128
    $region53: #{tpu_custom_call.1} parent=1 // pred_fallthru
      _
    %1822 = vsyncpa [#allocation4], 1
    %1823 = vsyncpa [#allocation7], 1
    %1824 = vsyncpa [#allocation10], 1
    %1825 = vsyncpa [#allocation5], 1

</llo_original>
